<compile_context>
chip_gen: v5e
topology: v5e:2x2
jax: 0.10.0
libtpu: 0.0.40
codegen_flags: <defaults>
</compile_context>

<pallas_src>
import jax
import jax.numpy as jnp
from jax import lax
from jax.experimental import pallas as pl
from jax.experimental.pallas import tpu as pltpu

LANE = 128


def _make_kernel(TH):
    """Kernel closure; TH = number of output rows processed per inner chunk."""

    def kernel(x_ref, w_ref, scale_ref, shift_ref, o_ref):
        # x_ref:     (1, H+2, W+2, Cin)   zero-padded bf16 input (one image)
        # w_ref:     (9*Cin, CT)          bf16 im2col weights for this Cout tile
        # scale_ref: (1, CT)              BN scale  = gamma / sqrt(var + eps)
        # shift_ref: (1, CT)              BN shift  = scale*(bias - mean) + beta
        # o_ref:     (1, H, W, CT)        f32 output tile (CT = 128 lanes)
        H = o_ref.shape[1]
        W = o_ref.shape[2]
        Cin = x_ref.shape[3]
        CT = o_ref.shape[3]
        n_chunks = H // TH

        for c in range(n_chunks):           # static unrolled row-chunk loop
            r0 = c * TH
            # im2col: 9 shifted taps concatenated on the lane axis -> one
            # (TH*W, 9*Cin) patch, contracted in a single MXU matmul.
            taps = []
            for ky in range(3):
                for kx in range(3):
                    taps.append(x_ref[0, r0 + ky:r0 + ky + TH, kx:kx + W, :])
            patch = jnp.concatenate(taps, axis=-1).reshape(TH * W, 9 * Cin)

            acc = jnp.dot(patch, w_ref[...],
                          preferred_element_type=jnp.float32)   # (TH*W, CT) f32

            # Fused BatchNorm (folded per-channel affine) + ReLU.
            y = jnp.maximum(acc * scale_ref[0] + shift_ref[0], 0.0)
            o_ref[0, r0:r0 + TH, :, :] = y.reshape(TH, W, CT).astype(o_ref.dtype)

    return kernel


def conv_bn_relu(x_nchw, w_hwio, conv_bias, gamma, beta, run_mean, run_var,
                 eps=1e-5):
    """ConvBNReLU forward. x_nchw: (N, Cin, H, W) f32 -> (N, Cout, H, W) f32."""
    N, Cin, H, W = x_nchw.shape
    Cout = w_hwio.shape[-1]
    Cout_p = ((Cout + LANE - 1) // LANE) * LANE          # lane-dense channels

    # Fold conv bias + eval-mode BN into one per-channel affine (f32, exact).
    scale = gamma / jnp.sqrt(run_var + eps)              # (Cout,)
    shift = scale * (conv_bias - run_mean) + beta        # (Cout,)
    scale_p = jnp.zeros((1, Cout_p), jnp.float32).at[0, :Cout].set(scale)
    shift_p = jnp.zeros((1, Cout_p), jnp.float32).at[0, :Cout].set(shift)

    # Weights: (3,3,Cin,Cout) -> im2col layout (9*Cin, Cout_p), bf16.
    w2d = w_hwio.reshape(9 * Cin, Cout).astype(jnp.bfloat16)
    w2d_p = jnp.zeros((9 * Cin, Cout_p), jnp.bfloat16).at[:, :Cout].set(w2d)

    # NCHW -> NHWC, cast to bf16, zero-pad spatial by 1 (conv padding=1).
    x_nhwc = jnp.transpose(x_nchw, (0, 2, 3, 1)).astype(jnp.bfloat16)
    x_pad = jnp.pad(x_nhwc, ((0, 0), (1, 1), (1, 1), (0, 0)))

    # Row-chunk size: keep the live f32 accumulator (TH*W, 128) bounded.
    max_th = max(1, min(H, 256 // max(W, 1)))
    TH = 1
    for cand in range(max_th, 0, -1):
        if H % cand == 0:
            TH = cand
            break

    n_ct = Cout_p // LANE
    kernel = _make_kernel(TH)

    out_nhwc = pl.pallas_call(
        kernel,
        out_shape=jax.ShapeDtypeStruct((N, H, W, Cout_p), jnp.float32),
        grid_spec=pltpu.PrefetchScalarGridSpec(
            num_scalar_prefetch=0,
            grid=(N, n_ct),
            in_specs=[
                pl.BlockSpec((1, H + 2, W + 2, Cin), lambda n, j: (n, 0, 0, 0)),
                pl.BlockSpec((9 * Cin, LANE), lambda n, j: (0, j)),
                pl.BlockSpec((1, LANE), lambda n, j: (0, j)),
                pl.BlockSpec((1, LANE), lambda n, j: (0, j)),
            ],
            out_specs=pl.BlockSpec((1, H, W, LANE), lambda n, j: (n, 0, 0, j)),
        ),
        compiler_params=pltpu.CompilerParams(
            dimension_semantics=("parallel", "parallel"),
            vmem_limit_bytes=32 * 1024 * 1024,
        ),
    )(x_pad, w2d_p, scale_p, shift_p)

    # Drop channel padding, NHWC -> NCHW.
    return jnp.transpose(out_nhwc[..., :Cout], (0, 3, 1, 2))


def _reference(x_nchw, w_hwio, conv_bias, gamma, beta, run_mean, run_var,
               eps=1e-5):
    # Pure-JAX reference (NCHW conv, eval-mode BN, ReLU).
    w_oihw = jnp.transpose(w_hwio, (3, 2, 0, 1))
    y = lax.conv_general_dilated(
        x_nchw, w_oihw, window_strides=(1, 1), padding=((1, 1), (1, 1)),
        dimension_numbers=("NCHW", "OIHW", "NCHW"))
    y = y + conv_bias[None, :, None, None]
    y = (y - run_mean[None, :, None, None]) / jnp.sqrt(
        run_var[None, :, None, None] + eps)
    y = y * gamma[None, :, None, None] + beta[None, :, None, None]
    return jnp.maximum(y, 0.0)


if __name__ == "__main__":
    key = jax.random.PRNGKey(0)
    N, Cin, Cout, H, W = 2, 4, 8, 16, 16

    k_x, k_w, k_b = jax.random.split(key, 3)
    x = jax.random.normal(k_x, (N, Cin, H, W), dtype=jnp.float32)

    # Deterministic synthetic params (matches nn.Conv2d / BatchNorm2d shapes).
    fan_in = Cin * 3 * 3
    bound = 1.0 / (fan_in ** 0.5)
    w_hwio = jax.random.uniform(k_w, (3, 3, Cin, Cout), jnp.float32,
                                minval=-bound, maxval=bound)
    conv_bias = jax.random.uniform(k_b, (Cout,), jnp.float32,
                                   minval=-bound, maxval=bound)
    gamma = jnp.ones((Cout,), jnp.float32)        # BN weight
    beta = jnp.zeros((Cout,), jnp.float32)        # BN bias
    run_mean = jnp.zeros((Cout,), jnp.float32)    # BN running_mean
    run_var = jnp.ones((Cout,), jnp.float32)      # BN running_var

    out = conv_bn_relu(x, w_hwio, conv_bias, gamma, beta, run_mean, run_var)
    out = jax.block_until_ready(out)
    assert out.shape == (N, Cout, H, W)

    # Tight check vs. a reference that sees the same bf16-rounded operands
    # (kernel accumulates in f32), plus a looser check vs. the pure-f32 module.
    x_bf = x.astype(jnp.bfloat16).astype(jnp.float32)
    w_bf = w_hwio.astype(jnp.bfloat16).astype(jnp.float32)
    ref_bf = _reference(x_bf, w_bf, conv_bias, gamma, beta, run_mean, run_var)
    ref_f32 = _reference(x, w_hwio, conv_bias, gamma, beta, run_mean, run_var)
    assert jnp.allclose(out, ref_bf, atol=1e-2, rtol=1e-2), "mismatch (bf16 ref)"
    assert jnp.allclose(out, ref_f32, atol=6e-2, rtol=6e-2), "mismatch (f32 ref)"

    print("KERNEL_OK")
</pallas_src>

<mosaic_0001>
module attributes {stable_mosaic.version = 11 : i64} {
  func.func @kernel(%arg0: i32, %arg1: i32, %arg2: memref<1x18x18x4xbf16, #tpu.memory_space<vmem>>, %arg3: memref<36x128xbf16, #tpu.memory_space<vmem>>, %arg4: memref<1x128xf32, #tpu.memory_space<vmem>>, %arg5: memref<1x128xf32, #tpu.memory_space<vmem>>, %arg6: memref<1x16x16x128xf32, #tpu.memory_space<vmem>>) attributes {dimension_semantics = [#tpu.dimension_semantics<parallel>, #tpu.dimension_semantics<parallel>], iteration_bounds = array<i64: 2, 1>, scalar_prefetch = 0 : i64, scratch_operands = 0 : i64, tpu.core_type = #tpu.core_type<tc>, window_params = [{transform_indices = @transform_0, window_bounds = array<i64: 1, 18, 18, 4>}, {transform_indices = @transform_1, window_bounds = array<i64: 36, 128>}, {transform_indices = @transform_2, window_bounds = array<i64: 1, 128>}, {transform_indices = @transform_3, window_bounds = array<i64: 1, 128>}, {transform_indices = @transform_4, window_bounds = array<i64: 1, 16, 16, 128>}]} {
    %c0 = arith.constant 0 : index
    %c0_0 = arith.constant 0 : index
    %c0_1 = arith.constant 0 : index
    %c0_2 = arith.constant 0 : index
    %0 = vector.load %arg2[%c0, %c0_0, %c0_1, %c0_2] : memref<1x18x18x4xbf16, #tpu.memory_space<vmem>>, vector<1x16x16x4xbf16>
    %1 = vector.shape_cast %0 : vector<1x16x16x4xbf16> to vector<16x16x4xbf16>
    %c0_3 = arith.constant 0 : index
    %c0_4 = arith.constant 0 : index
    %c1 = arith.constant 1 : index
    %c0_5 = arith.constant 0 : index
    %2 = vector.load %arg2[%c0_3, %c0_4, %c1, %c0_5] : memref<1x18x18x4xbf16, #tpu.memory_space<vmem>>, vector<1x16x16x4xbf16>
    %3 = vector.shape_cast %2 : vector<1x16x16x4xbf16> to vector<16x16x4xbf16>
    %c0_6 = arith.constant 0 : index
    %c0_7 = arith.constant 0 : index
    %c2 = arith.constant 2 : index
    %c0_8 = arith.constant 0 : index
    %4 = vector.load %arg2[%c0_6, %c0_7, %c2, %c0_8] : memref<1x18x18x4xbf16, #tpu.memory_space<vmem>>, vector<1x16x16x4xbf16>
    %5 = vector.shape_cast %4 : vector<1x16x16x4xbf16> to vector<16x16x4xbf16>
    %c0_9 = arith.constant 0 : index
    %c1_10 = arith.constant 1 : index
    %c0_11 = arith.constant 0 : index
    %c0_12 = arith.constant 0 : index
    %6 = vector.load %arg2[%c0_9, %c1_10, %c0_11, %c0_12] : memref<1x18x18x4xbf16, #tpu.memory_space<vmem>>, vector<1x16x16x4xbf16>
    %7 = vector.shape_cast %6 : vector<1x16x16x4xbf16> to vector<16x16x4xbf16>
    %c0_13 = arith.constant 0 : index
    %c1_14 = arith.constant 1 : index
    %c1_15 = arith.constant 1 : index
    %c0_16 = arith.constant 0 : index
    %8 = vector.load %arg2[%c0_13, %c1_14, %c1_15, %c0_16] : memref<1x18x18x4xbf16, #tpu.memory_space<vmem>>, vector<1x16x16x4xbf16>
    %9 = vector.shape_cast %8 : vector<1x16x16x4xbf16> to vector<16x16x4xbf16>
    %c0_17 = arith.constant 0 : index
    %c1_18 = arith.constant 1 : index
    %c2_19 = arith.constant 2 : index
    %c0_20 = arith.constant 0 : index
    %10 = vector.load %arg2[%c0_17, %c1_18, %c2_19, %c0_20] : memref<1x18x18x4xbf16, #tpu.memory_space<vmem>>, vector<1x16x16x4xbf16>
    %11 = vector.shape_cast %10 : vector<1x16x16x4xbf16> to vector<16x16x4xbf16>
    %c0_21 = arith.constant 0 : index
    %c2_22 = arith.constant 2 : index
    %c0_23 = arith.constant 0 : index
    %c0_24 = arith.constant 0 : index
    %12 = vector.load %arg2[%c0_21, %c2_22, %c0_23, %c0_24] : memref<1x18x18x4xbf16, #tpu.memory_space<vmem>>, vector<1x16x16x4xbf16>
    %13 = vector.shape_cast %12 : vector<1x16x16x4xbf16> to vector<16x16x4xbf16>
    %c0_25 = arith.constant 0 : index
    %c2_26 = arith.constant 2 : index
    %c1_27 = arith.constant 1 : index
    %c0_28 = arith.constant 0 : index
    %14 = vector.load %arg2[%c0_25, %c2_26, %c1_27, %c0_28] : memref<1x18x18x4xbf16, #tpu.memory_space<vmem>>, vector<1x16x16x4xbf16>
    %15 = vector.shape_cast %14 : vector<1x16x16x4xbf16> to vector<16x16x4xbf16>
    %c0_29 = arith.constant 0 : index
    %c2_30 = arith.constant 2 : index
    %c2_31 = arith.constant 2 : index
    %c0_32 = arith.constant 0 : index
    %16 = vector.load %arg2[%c0_29, %c2_30, %c2_31, %c0_32] : memref<1x18x18x4xbf16, #tpu.memory_space<vmem>>, vector<1x16x16x4xbf16>
    %17 = vector.shape_cast %16 : vector<1x16x16x4xbf16> to vector<16x16x4xbf16>
    %18 = tpu.concatenate %1, %3, %5, %7, %9, %11, %13, %15, %17 in 2 : vector<16x16x4xbf16>, vector<16x16x4xbf16>, vector<16x16x4xbf16>, vector<16x16x4xbf16>, vector<16x16x4xbf16>, vector<16x16x4xbf16>, vector<16x16x4xbf16>, vector<16x16x4xbf16>, vector<16x16x4xbf16> -> vector<16x16x36xbf16>
    %19 = vector.shape_cast %18 : vector<16x16x36xbf16> to vector<256x36xbf16>
    %c0_33 = arith.constant 0 : index
    %c0_34 = arith.constant 0 : index
    %20 = vector.load %arg3[%c0_33, %c0_34] : memref<36x128xbf16, #tpu.memory_space<vmem>>, vector<36x128xbf16>
    %cst = arith.constant dense<0.000000e+00> : vector<256x128xf32>
    %21 = tpu.matmul %19, %20, %cst {dimension_numbers = #tpu.dot_dimension_numbers<[1], [0], [0], [1], [0, 0, 1, 1], [], []>} : vector<256x36xbf16>, vector<36x128xbf16>, vector<256x128xf32> -> vector<256x128xf32>
    %c0_35 = arith.constant 0 : index
    %c0_36 = arith.constant 0 : index
    %22 = vector.load %arg4[%c0_35, %c0_36] : memref<1x128xf32, #tpu.memory_space<vmem>>, vector<1x128xf32>
    %23 = vector.shape_cast %22 : vector<1x128xf32> to vector<128xf32>
    %24 = vector.shape_cast %23 : vector<128xf32> to vector<1x128xf32>
    %25 = vector.broadcast %24 : vector<1x128xf32> to vector<256x128xf32>
    %26 = arith.mulf %21, %25 : vector<256x128xf32>
    %c0_37 = arith.constant 0 : index
    %c0_38 = arith.constant 0 : index
    %27 = vector.load %arg5[%c0_37, %c0_38] : memref<1x128xf32, #tpu.memory_space<vmem>>, vector<1x128xf32>
    %28 = vector.shape_cast %27 : vector<1x128xf32> to vector<128xf32>
    %29 = vector.shape_cast %28 : vector<128xf32> to vector<1x128xf32>
    %30 = vector.broadcast %29 : vector<1x128xf32> to vector<256x128xf32>
    %31 = arith.addf %26, %30 : vector<256x128xf32>
    %cst_39 = arith.constant 0.000000e+00 : f32
    %32 = vector.broadcast %cst_39 : f32 to vector<256x128xf32>
    %33 = arith.maximumf %31, %32 : vector<256x128xf32>
    %34 = vector.shape_cast %33 : vector<256x128xf32> to vector<16x16x128xf32>
    %c0_40 = arith.constant 0 : index
    %c0_41 = arith.constant 0 : index
    %c0_42 = arith.constant 0 : index
    %c0_43 = arith.constant 0 : index
    %35 = vector.load %arg6[%c0_40, %c0_41, %c0_42, %c0_43] : memref<1x16x16x128xf32, #tpu.memory_space<vmem>>, vector<1x16x16x128xf32>
    %36 = vector.shape_cast %35 : vector<1x16x16x128xf32> to vector<16x16x128xf32>
    %37 = vector.shape_cast %34 : vector<16x16x128xf32> to vector<1x16x16x128xf32>
    tpu.vector_store %arg6[%c0_40, %c0_41, %c0_42, %c0_43], %37 {strides = array<i32>} : memref<1x16x16x128xf32, #tpu.memory_space<vmem>>, vector<1x16x16x128xf32>,
    return
  }
  func.func @transform_0(%arg0: i32, %arg1: i32) -> (i32, i32, i32, i32) {
    %c0_i32 = arith.constant 0 : i32
    %c0_i32_0 = arith.constant 0 : i32
    %c0_i32_1 = arith.constant 0 : i32
    %c0_i32_2 = arith.constant 0 : i32
    return %arg0, %c0_i32, %c0_i32_0, %c0_i32_1 : i32, i32, i32, i32
  }
  func.func @transform_1(%arg0: i32, %arg1: i32) -> (i32, i32) {
    %c0_i32 = arith.constant 0 : i32
    %c0_i32_0 = arith.constant 0 : i32
    return %c0_i32, %arg1 : i32, i32
  }
  func.func @transform_2(%arg0: i32, %arg1: i32) -> (i32, i32) {
    %c0_i32 = arith.constant 0 : i32
    %c0_i32_0 = arith.constant 0 : i32
    return %c0_i32, %arg1 : i32, i32
  }
  func.func @transform_3(%arg0: i32, %arg1: i32) -> (i32, i32) {
    %c0_i32 = arith.constant 0 : i32
    %c0_i32_0 = arith.constant 0 : i32
    return %c0_i32, %arg1 : i32, i32
  }
  func.func @transform_4(%arg0: i32, %arg1: i32) -> (i32, i32, i32, i32) {
    %c0_i32 = arith.constant 0 : i32
    %c0_i32_0 = arith.constant 0 : i32
    %c0_i32_1 = arith.constant 0 : i32
    return %arg0, %c0_i32, %c0_i32_0, %arg1 : i32, i32, i32, i32
  }
}

</mosaic_0001>

<llo_original>
// kernel: tpu_custom_call.1
$region0: #{tpu_custom_call.1}
  #allocation0 [shape = 'u32[]', space=smem, size = 0x4, offset = 0x4, fixed_abs, tag = 'smem constant byte address 0x4 - core index']
  #allocation1 [shape = 'u32[72,128]{1,0:T(1,128)}', space=vmem, size = 0x9000, scoped, tag = 'internal scratch']
  %s0 = inlined_call_operand.vmem [shape: bf16[2,18,18,4], index: 0, kind: input, shape index: {}]
  %s1 = inlined_call_operand.vmem [shape: bf16[36,128], index: 1, kind: input, shape index: {}]
  %s2 = inlined_call_operand.vmem [shape: f32[1,128], index: 2, kind: input, shape index: {}]
  %s3 = inlined_call_operand.vmem [shape: f32[1,128], index: 3, kind: input, shape index: {}]
  %s4 = inlined_call_operand.hbm [shape: f32[2,16,16,128], index: 4, kind: output, shape index: {}]
  %s5 = sld [smem:[#allocation0]]
  $region49: #{tpu_custom_call.1} parent=0
    _
  %s7 = ssub.s32 1, %s5
  %s8 = scalar_select 0, %s7, %s5
  $region1: #{tpu_custom_call.1} parent=0
    #allocation2 [shape = 'u8[262144]{0}', space=vmem, size = 0x40000, scoped, tag = 'output window, operand 0']
    #allocation3 [shape = 's32[2]{0}', space=sflag, size = 0x8, scoped, tag = 'scoped memory for tpu_custom_call.1']
    %9 = vsyncpa [#allocation3], 0
    %s10 = scalar_lea.sflag [#allocation3], 1
    %11 = vsyncpa %s10, 0
    loop: start=0, step=1, limit=4
    $region2: #{tpu_custom_call.1} parent=1 // loop_pre_header
      _
    $region3: #{tpu_custom_call.1} parent=1 // loop_header
      %s13 = sphi 0, %s17
      %p14 = scmp.ge.s32.totalorder %s13, 4
      %s20 = sphi 0, %s32
      %s21 = sphi 0, %s28
      %s22 = sphi 0, %s20
      %s23 = sphi 0, %s21
      %s24 = sphi 0, %s22
      %s25 = sphi 0, %s23
      %s35 = sphi 0, %s37
      %s38 = sphi 0, %s35
      %s39 = sphi 0, %s38
      %s55 = sphi 0, %s39
      %s61 = sphi 0, %s63
      %s64 = sphi 0, %s61
      %s65 = sphi 0, %s64
      %s81 = sphi 0, %s65
      %s87 = sphi 0, %s89
      %s90 = sphi 0, %s87
      %s91 = sphi 0, %s90
      %s107 = sphi 0, %s91
      %s113 = sphi 0, %s115
      %s116 = sphi 0, %s113
      %s117 = sphi 0, %s116
      %s133 = sphi 0, %s117
      %s141 = sphi 0, %s143
      %s144 = sphi 0, %s141
      %s145 = sphi 0, %s144
      %s161 = sphi 0, %s145
    $region4: #{tpu_custom_call.1} parent=1 // loop_header_branch
      %16 = sbr.rel (%p14) target = $region8
    $region5: #{tpu_custom_call.1} parent=1 // loop_body
      %s18 = ssub.s32 %s13, 1
      %s19 = ssub.s32 %s13, 2
      %s26 = sadd.s32 1, %s21
      %p27 = scmp.ge.s32.totalorder %s26, 1
      %s28 = scalar_select %p27, 0, %s26
      %s29 = sadd.s32 1, %s20
      %s30 = scalar_select %p27, %s29, %s20
      %p31 = scmp.ge.s32.totalorder %s30, 2
      %s32 = scalar_select %p31, 0, %s30
      %s33 = ssub.s32 %s20, %s32
      %p34 = scmp.eq.s32.totalorder %s33, 0
      %s36 = sadd.s32 %s35, 1
      %s37 = scalar_select %p34, %s35, %s36
      %p40 = pneg %p34
      %p41 = scmp.eq.s32.totalorder %s13, 1
      %p42 = por %p40, %p41
      %p43 = scmp.ne.s32.totalorder %s35, %s38
      %p44 = scmp.eq.s32.totalorder %s13, 0
      %p45 = por %p43, %p44
      %p46 = scmp.ne.s32.totalorder %s35, %s38
      %p47 = scmp.eq.s32.totalorder %s18, 1
      %p48 = por %p46, %p47
      %p49 = scmp.ne.s32.totalorder %s38, %s39
      %p50 = scmp.eq.s32.totalorder %s18, 0
      %p51 = por %p49, %p50
      %p52 = scmp.ne.s32.totalorder %s38, %s39
      %p53 = scmp.eq.s32.totalorder %s19, 1
      %p54 = por %p52, %p53
      %p56 = scmp.ne.s32.totalorder %s39, %s55
      %p57 = scmp.eq.s32.totalorder %s19, 0
      %p58 = por %p56, %p57
      %s59 = ssub.s32 %s21, %s28
      %p60 = scmp.eq.s32.totalorder %s59, 0
      %s62 = sadd.s32 %s61, 1
      %s63 = scalar_select %p60, %s61, %s62
      %p66 = pneg %p60
      %p67 = scmp.eq.s32.totalorder %s13, 1
      %p68 = por %p66, %p67
      %p69 = scmp.ne.s32.totalorder %s61, %s64
      %p70 = scmp.eq.s32.totalorder %s13, 0
      %p71 = por %p69, %p70
      %p72 = scmp.ne.s32.totalorder %s61, %s64
      %p73 = scmp.eq.s32.totalorder %s18, 1
      %p74 = por %p72, %p73
      %p75 = scmp.ne.s32.totalorder %s64, %s65
      %p76 = scmp.eq.s32.totalorder %s18, 0
      %p77 = por %p75, %p76
      %p78 = scmp.ne.s32.totalorder %s64, %s65
      %p79 = scmp.eq.s32.totalorder %s19, 1
      %p80 = por %p78, %p79
      %p82 = scmp.ne.s32.totalorder %s65, %s81
      %p83 = scmp.eq.s32.totalorder %s19, 0
      %p84 = por %p82, %p83
      %s85 = ssub.s32 %s21, %s28
      %p86 = scmp.eq.s32.totalorder %s85, 0
      %s88 = sadd.s32 %s87, 1
      %s89 = scalar_select %p86, %s87, %s88
      %p92 = pneg %p86
      %p93 = scmp.eq.s32.totalorder %s13, 1
      %p94 = por %p92, %p93
      %p95 = scmp.ne.s32.totalorder %s87, %s90
      %p96 = scmp.eq.s32.totalorder %s13, 0
      %p97 = por %p95, %p96
      %p98 = scmp.ne.s32.totalorder %s87, %s90
      %p99 = scmp.eq.s32.totalorder %s18, 1
      %p100 = por %p98, %p99
      %p101 = scmp.ne.s32.totalorder %s90, %s91
      %p102 = scmp.eq.s32.totalorder %s18, 0
      %p103 = por %p101, %p102
      %p104 = scmp.ne.s32.totalorder %s90, %s91
      %p105 = scmp.eq.s32.totalorder %s19, 1
      %p106 = por %p104, %p105
      %p108 = scmp.ne.s32.totalorder %s91, %s107
      %p109 = scmp.eq.s32.totalorder %s19, 0
      %p110 = por %p108, %p109
      %s111 = ssub.s32 %s21, %s28
      %p112 = scmp.eq.s32.totalorder %s111, 0
      %s114 = sadd.s32 %s113, 1
      %s115 = scalar_select %p112, %s113, %s114
      %p118 = pneg %p112
      %p119 = scmp.eq.s32.totalorder %s13, 1
      %p120 = por %p118, %p119
      %p121 = scmp.ne.s32.totalorder %s113, %s116
      %p122 = scmp.eq.s32.totalorder %s13, 0
      %p123 = por %p121, %p122
      %p124 = scmp.ne.s32.totalorder %s113, %s116
      %p125 = scmp.eq.s32.totalorder %s18, 1
      %p126 = por %p124, %p125
      %p127 = scmp.ne.s32.totalorder %s116, %s117
      %p128 = scmp.eq.s32.totalorder %s18, 0
      %p129 = por %p127, %p128
      %p130 = scmp.ne.s32.totalorder %s116, %s117
      %p131 = scmp.eq.s32.totalorder %s19, 1
      %p132 = por %p130, %p131
      %p134 = scmp.ne.s32.totalorder %s117, %s133
      %p135 = scmp.eq.s32.totalorder %s19, 0
      %p136 = por %p134, %p135
      %s137 = ssub.s32 %s20, %s32
      %s138 = ssub.s32 %s21, %s28
      %s139 = sor.u32 %s137, %s138
      %p140 = scmp.eq.s32.totalorder %s139, 0
      %s142 = sadd.s32 %s141, 1
      %s143 = scalar_select %p140, %s141, %s142
      %p146 = pneg %p140
      %p147 = scmp.eq.s32.totalorder %s13, 1
      %p148 = por %p146, %p147
      %p149 = scmp.ne.s32.totalorder %s141, %s144
      %p150 = scmp.eq.s32.totalorder %s13, 0
      %p151 = por %p149, %p150
      %p152 = scmp.ne.s32.totalorder %s141, %s144
      %p153 = scmp.eq.s32.totalorder %s18, 1
      %p154 = por %p152, %p153
      %p155 = scmp.ne.s32.totalorder %s144, %s145
      %p156 = scmp.eq.s32.totalorder %s18, 0
      %p157 = por %p155, %p156
      %p158 = scmp.ne.s32.totalorder %s144, %s145
      %p159 = scmp.eq.s32.totalorder %s19, 1
      %p160 = por %p158, %p159
      %p162 = scmp.ne.s32.totalorder %s145, %s161
      %p163 = scmp.eq.s32.totalorder %s19, 0
      %p164 = por %p162, %p163
      %p165 = scmp.le.s32.totalorder 1, %s13
      %p166 = scmp.lt.s32.totalorder %s13, 3
      %p167 = pnand %p165, %p166
      %p168 = pneg %p167
      // Predicated region
      $region9: #{tpu_custom_call.1} parent=5 // pred_check
        _
      $region10: #{tpu_custom_call.1} parent=5 // pred_check_branch
        %170 = sbr.rel (%p167) target = $region12
      $region11: #{tpu_custom_call.1} parent=5 // pred_region
        %s171 = ssub.s32 %s13, 1
        // Predicated region
        $region13: #{tpu_custom_call.1} parent=11 // pred_check
          %p172 = pneg %p77
        $region14: #{tpu_custom_call.1} parent=11 // pred_check_branch
          %174 = sbr.rel (%p172) target = $region16
        $region15: #{tpu_custom_call.1} parent=11 // pred_region
          %p175 = scmp.lt.s32.totalorder %s23, 0
          %s176 = scalar_select %p175, %s23, 0
          %s177 = smul.addr %s176, 4
          %s178 = scalar_lea.vmem %s1, %s177
        $region16: #{tpu_custom_call.1} parent=11 // pred_fallthru
          _
        // Predicated region
        $region17: #{tpu_custom_call.1} parent=11 // pred_check
          %p179 = pneg %p103
        $region18: #{tpu_custom_call.1} parent=11 // pred_check_branch
          %181 = sbr.rel (%p179) target = $region20
        $region19: #{tpu_custom_call.1} parent=11 // pred_region
          %p182 = scmp.lt.s32.totalorder %s23, 0
          %s183 = scalar_select %p182, %s23, 0
          %s184 = scalar_lea.vmem %s2, %s183
        $region20: #{tpu_custom_call.1} parent=11 // pred_fallthru
          _
        // Predicated region
        $region21: #{tpu_custom_call.1} parent=11 // pred_check
          %p185 = pneg %p129
        $region22: #{tpu_custom_call.1} parent=11 // pred_check_branch
          %187 = sbr.rel (%p185) target = $region24
        $region23: #{tpu_custom_call.1} parent=11 // pred_region
          %p188 = scmp.lt.s32.totalorder %s23, 0
          %s189 = scalar_select %p188, %s23, 0
          %s190 = scalar_lea.vmem %s3, %s189
        $region24: #{tpu_custom_call.1} parent=11 // pred_fallthru
          _
      $region12: #{tpu_custom_call.1} parent=5 // pred_fallthru
        _
      %p191 = scmp.lt.s32.totalorder %s13, 2
      // Predicated region
      $region25: #{tpu_custom_call.1} parent=5 // pred_check
        %p192 = pneg %p191
      $region26: #{tpu_custom_call.1} parent=5 // pred_check_branch
        %194 = sbr.rel (%p192) target = $region28
      $region27: #{tpu_custom_call.1} parent=5 // pred_region
        // Predicated region
        $region29: #{tpu_custom_call.1} parent=27 // pred_check
          %p195 = pneg %p45
        $region30: #{tpu_custom_call.1} parent=27 // pred_check_branch
          %197 = sbr.rel (%p195) target = $region32
        $region31: #{tpu_custom_call.1} parent=27 // pred_region
          %p198 = scmp.lt.s32.totalorder %s20, 1
          %s199 = scalar_select %p198, %s20, 1
          %s200 = smul.addr %s199, 54
          %s201 = smul.addr %s200, 4
          %s202 = scalar_lea.vmem %s0, %s201
        $region32: #{tpu_custom_call.1} parent=27 // pred_fallthru
          _
      $region28: #{tpu_custom_call.1} parent=5 // pred_fallthru
        _
      %p203 = scmp.le.s32.totalorder 1, %s13
      %p204 = scmp.lt.s32.totalorder %s13, 3
      %p205 = pnand %p203, %p204
      %p206 = pneg %p205
      // Predicated region
      $region33: #{tpu_custom_call.1} parent=5 // pred_check
        _
      $region34: #{tpu_custom_call.1} parent=5 // pred_check_branch
        %208 = sbr.rel (%p205) target = $region36
      $region35: #{tpu_custom_call.1} parent=5 // pred_region
        %s209 = ssub.s32 %s13, 1
        %p210 = scmp.lt.s32.totalorder %s22, 1
        %s211 = scalar_select %p210, %s22, 1
        %s212 = smul.addr %s211, 54
        %s213 = smul.addr %s212, 4
        %s214 = scalar_lea.vmem %s0, %s213
        %p215 = pneg %p51
        %p216 = pneg %p48
        %p217 = scmp.lt.s32.totalorder %s23, 0
        %s218 = scalar_select %p217, %s23, 0
        %s219 = smul.addr %s218, 4
        %s220 = scalar_lea.vmem %s1, %s219
        %p221 = pneg %p77
        %p222 = pneg %p74
        %p223 = scmp.lt.s32.totalorder %s23, 0
        %s224 = scalar_select %p223, %s23, 0
        %s225 = scalar_lea.vmem %s2, %s224
        %p226 = pneg %p103
        %p227 = pneg %p100
        %p228 = scmp.lt.s32.totalorder %s23, 0
        %s229 = scalar_select %p228, %s23, 0
        %s230 = scalar_lea.vmem %s3, %s229
        %p231 = pneg %p129
        %p232 = pneg %p126
        %p233 = pneg %p157
        %p234 = pneg %p154
        %s235 = sand.u32 %s144, 1
        %s236 = scalar_lea.sflag [#allocation3], %s235
        %s237 = sand.u32 %s144, 1
        %s238 = smul.addr %s237, 256
        %s239 = scalar_lea.vmem [#allocation2], %s238
        %p240 = scmp.lt.s32.totalorder %s22, 1
        %s241 = scalar_select %p240, %s22, 1
        %s242 = smul.addr %s241, 54
        %s243 = smul.addr %s242, 4
        %s244 = scalar_lea.vmem %s0, %s243
        %p245 = scmp.lt.s32.totalorder %s23, 0
        %s246 = scalar_select %p245, %s23, 0
        %s247 = smul.addr %s246, 4
        %s248 = scalar_lea.vmem %s1, %s247
        %p249 = scmp.lt.s32.totalorder %s23, 0
        %s250 = scalar_select %p249, %s23, 0
        %s251 = scalar_lea.vmem %s2, %s250
        %p252 = scmp.lt.s32.totalorder %s23, 0
        %s253 = scalar_select %p252, %s23, 0
        %s254 = scalar_lea.vmem %s3, %s253
        %v256 = vld [vmem:[%s244] sm:$0xf]
        %v257 = vld [vmem:[%s244 + $0x4] sm:$0xf]
        %v258 = vld [vmem:[%s244 + $0xc] sm:$0xf]
        %v259 = vld [vmem:[%s244 + $0x10] sm:$0xf]
        %v260 = vld [vmem:[%s244 + $0x18] sm:$0xf]
        %v261 = vld [vmem:[%s244 + $0x1c] sm:$0xf]
        %v262 = vld [vmem:[%s244 + $0x24] sm:$0xf]
        %v263 = vld [vmem:[%s244 + $0x28] sm:$0xf]
        %v264 = vld [vmem:[%s244 + $0x30] sm:$0xf]
        %v265 = vld [vmem:[%s244 + $0x34] sm:$0xf]
        %v266 = vld [vmem:[%s244 + $0x3c] sm:$0xf]
        %v267 = vld [vmem:[%s244 + $0x40] sm:$0xf]
        %v268 = vld [vmem:[%s244 + $0x48] sm:$0xf]
        %v269 = vld [vmem:[%s244 + $0x4c] sm:$0xf]
        %v270 = vld [vmem:[%s244 + $0x54] sm:$0xf]
        %v271 = vld [vmem:[%s244 + $0x58] sm:$0xf]
        %v272 = vld [vmem:[%s244 + $0x60] sm:$0xf]
        %v273 = vld [vmem:[%s244 + $0x64] sm:$0xf]
        %v274 = vld [vmem:[%s244 + $0x6c] sm:$0xf]
        %v275 = vld [vmem:[%s244 + $0x70] sm:$0xf]
        %v276 = vld [vmem:[%s244 + $0x78] sm:$0xf]
        %v277 = vld [vmem:[%s244 + $0x7c] sm:$0xf]
        %v278 = vld [vmem:[%s244 + $0x84] sm:$0xf]
        %v279 = vld [vmem:[%s244 + $0x88] sm:$0xf]
        %v280 = vld [vmem:[%s244 + $0x90] sm:$0xf]
        %v281 = vld [vmem:[%s244 + $0x94] sm:$0xf]
        %v282 = vld [vmem:[%s244 + $0x9c] sm:$0xf]
        %v283 = vld [vmem:[%s244 + $0xa0] sm:$0xf]
        %v284 = vld [vmem:[%s244 + $0xa8] sm:$0xf]
        %v285 = vld [vmem:[%s244 + $0xac] sm:$0xf]
        %v286 = vld [vmem:[%s244 + $0xb4] sm:$0xf]
        %v287 = vld [vmem:[%s244 + $0xb8] sm:$0xf]
        %v288 = vld [vmem:[%s244 + $0x8] sm:$0x1]
        %v289 = vld [vmem:[%s244 + $0x14] sm:$0x1]
        %v290 = vld [vmem:[%s244 + $0x20] sm:$0x1]
        %v291 = vld [vmem:[%s244 + $0x2c] sm:$0x1]
        %v292 = vld [vmem:[%s244 + $0x38] sm:$0x1]
        %v293 = vld [vmem:[%s244 + $0x44] sm:$0x1]
        %v294 = vld [vmem:[%s244 + $0x50] sm:$0x1]
        %v295 = vld [vmem:[%s244 + $0x5c] sm:$0x1]
        %v296 = vld [vmem:[%s244 + $0x68] sm:$0x1]
        %v297 = vld [vmem:[%s244 + $0x74] sm:$0x1]
        %v298 = vld [vmem:[%s244 + $0x80] sm:$0x1]
        %v299 = vld [vmem:[%s244 + $0x8c] sm:$0x1]
        %v300 = vld [vmem:[%s244 + $0x98] sm:$0x1]
        %v301 = vld [vmem:[%s244 + $0xa4] sm:$0x1]
        %v302 = vld [vmem:[%s244 + $0xb0] sm:$0x1]
        %v303 = vld [vmem:[%s244 + $0xbc] sm:$0x1]
        %v304 = vld [vmem:[%s244] sm:$0xe]
        %v305 = vld [vmem:[%s244 + $0xc] sm:$0xe]
        %v306 = vld [vmem:[%s244 + $0x18] sm:$0xe]
        %v307 = vld [vmem:[%s244 + $0x24] sm:$0xe]
        %v308 = vld [vmem:[%s244 + $0x30] sm:$0xe]
        %v309 = vld [vmem:[%s244 + $0x3c] sm:$0xe]
        %v310 = vld [vmem:[%s244 + $0x48] sm:$0xe]
        %v311 = vld [vmem:[%s244 + $0x54] sm:$0xe]
        %v312 = vld [vmem:[%s244 + $0x60] sm:$0xe]
        %v313 = vld [vmem:[%s244 + $0x6c] sm:$0xe]
        %v314 = vld [vmem:[%s244 + $0x78] sm:$0xe]
        %v315 = vld [vmem:[%s244 + $0x84] sm:$0xe]
        %v316 = vld [vmem:[%s244 + $0x90] sm:$0xe]
        %v317 = vld [vmem:[%s244 + $0x9c] sm:$0xe]
        %v318 = vld [vmem:[%s244 + $0xa8] sm:$0xe]
        %v319 = vld [vmem:[%s244 + $0xb4] sm:$0xe]
        %s320 = scalar_lea.vmem %s244, 12
        %v321 = vld [vmem:[%s320] sm:$0xf]
        %v322 = vld [vmem:[%s320 + $0x4] sm:$0xf]
        %v323 = vld [vmem:[%s320 + $0xc] sm:$0xf]
        %v324 = vld [vmem:[%s320 + $0x10] sm:$0xf]
        %v325 = vld [vmem:[%s320 + $0x18] sm:$0xf]
        %v326 = vld [vmem:[%s320 + $0x1c] sm:$0xf]
        %v327 = vld [vmem:[%s320 + $0x24] sm:$0xf]
        %v328 = vld [vmem:[%s320 + $0x28] sm:$0xf]
        %v329 = vld [vmem:[%s320 + $0x30] sm:$0xf]
        %v330 = vld [vmem:[%s320 + $0x34] sm:$0xf]
        %v331 = vld [vmem:[%s320 + $0x3c] sm:$0xf]
        %v332 = vld [vmem:[%s320 + $0x40] sm:$0xf]
        %v333 = vld [vmem:[%s320 + $0x48] sm:$0xf]
        %v334 = vld [vmem:[%s320 + $0x4c] sm:$0xf]
        %v335 = vld [vmem:[%s320 + $0x54] sm:$0xf]
        %v336 = vld [vmem:[%s320 + $0x58] sm:$0xf]
        %v337 = vld [vmem:[%s320 + $0x60] sm:$0xf]
        %v338 = vld [vmem:[%s320 + $0x64] sm:$0xf]
        %v339 = vld [vmem:[%s320 + $0x6c] sm:$0xf]
        %v340 = vld [vmem:[%s320 + $0x70] sm:$0xf]
        %v341 = vld [vmem:[%s320 + $0x78] sm:$0xf]
        %v342 = vld [vmem:[%s320 + $0x7c] sm:$0xf]
        %v343 = vld [vmem:[%s320 + $0x84] sm:$0xf]
        %v344 = vld [vmem:[%s320 + $0x88] sm:$0xf]
        %v345 = vld [vmem:[%s320 + $0x90] sm:$0xf]
        %v346 = vld [vmem:[%s320 + $0x94] sm:$0xf]
        %v347 = vld [vmem:[%s320 + $0x9c] sm:$0xf]
        %v348 = vld [vmem:[%s320 + $0xa0] sm:$0xf]
        %v349 = vld [vmem:[%s320 + $0xa8] sm:$0xf]
        %v350 = vld [vmem:[%s320 + $0xac] sm:$0xf]
        %v351 = vld [vmem:[%s320 + $0xb4] sm:$0xf]
        %v352 = vld [vmem:[%s320 + $0xb8] sm:$0xf]
        %v353 = vld [vmem:[%s320 + $0x8] sm:$0x1]
        %v354 = vld [vmem:[%s320 + $0x14] sm:$0x1]
        %v355 = vld [vmem:[%s320 + $0x20] sm:$0x1]
        %v356 = vld [vmem:[%s320 + $0x2c] sm:$0x1]
        %v357 = vld [vmem:[%s320 + $0x38] sm:$0x1]
        %v358 = vld [vmem:[%s320 + $0x44] sm:$0x1]
        %v359 = vld [vmem:[%s320 + $0x50] sm:$0x1]
        %v360 = vld [vmem:[%s320 + $0x5c] sm:$0x1]
        %v361 = vld [vmem:[%s320 + $0x68] sm:$0x1]
        %v362 = vld [vmem:[%s320 + $0x74] sm:$0x1]
        %v363 = vld [vmem:[%s320 + $0x80] sm:$0x1]
        %v364 = vld [vmem:[%s320 + $0x8c] sm:$0x1]
        %v365 = vld [vmem:[%s320 + $0x98] sm:$0x1]
        %v366 = vld [vmem:[%s320 + $0xa4] sm:$0x1]
        %v367 = vld [vmem:[%s320 + $0xb0] sm:$0x1]
        %v368 = vld [vmem:[%s320 + $0xbc] sm:$0x1]
        %v369 = vld [vmem:[%s320] sm:$0xe]
        %v370 = vld [vmem:[%s320 + $0xc] sm:$0xe]
        %v371 = vld [vmem:[%s320 + $0x18] sm:$0xe]
        %v372 = vld [vmem:[%s320 + $0x24] sm:$0xe]
        %v373 = vld [vmem:[%s320 + $0x30] sm:$0xe]
        %v374 = vld [vmem:[%s320 + $0x3c] sm:$0xe]
        %v375 = vld [vmem:[%s320 + $0x48] sm:$0xe]
        %v376 = vld [vmem:[%s320 + $0x54] sm:$0xe]
        %v377 = vld [vmem:[%s320 + $0x60] sm:$0xe]
        %v378 = vld [vmem:[%s320 + $0x6c] sm:$0xe]
        %v379 = vld [vmem:[%s320 + $0x78] sm:$0xe]
        %v380 = vld [vmem:[%s320 + $0x84] sm:$0xe]
        %v381 = vld [vmem:[%s320 + $0x90] sm:$0xe]
        %v382 = vld [vmem:[%s320 + $0x9c] sm:$0xe]
        %v383 = vld [vmem:[%s320 + $0xa8] sm:$0xe]
        %v384 = vld [vmem:[%s320 + $0xb4] sm:$0xe]
        %s385 = scalar_lea.vmem %s244, 24
        %v386 = vld [vmem:[%s385] sm:$0xf]
        %v387 = vld [vmem:[%s385 + $0x4] sm:$0xf]
        %v388 = vld [vmem:[%s385 + $0xc] sm:$0xf]
        %v389 = vld [vmem:[%s385 + $0x10] sm:$0xf]
        %v390 = vld [vmem:[%s385 + $0x18] sm:$0xf]
        %v391 = vld [vmem:[%s385 + $0x1c] sm:$0xf]
        %v392 = vld [vmem:[%s385 + $0x24] sm:$0xf]
        %v393 = vld [vmem:[%s385 + $0x28] sm:$0xf]
        %v394 = vld [vmem:[%s385 + $0x30] sm:$0xf]
        %v395 = vld [vmem:[%s385 + $0x34] sm:$0xf]
        %v396 = vld [vmem:[%s385 + $0x3c] sm:$0xf]
        %v397 = vld [vmem:[%s385 + $0x40] sm:$0xf]
        %v398 = vld [vmem:[%s385 + $0x48] sm:$0xf]
        %v399 = vld [vmem:[%s385 + $0x4c] sm:$0xf]
        %v400 = vld [vmem:[%s385 + $0x54] sm:$0xf]
        %v401 = vld [vmem:[%s385 + $0x58] sm:$0xf]
        %v402 = vld [vmem:[%s385 + $0x60] sm:$0xf]
        %v403 = vld [vmem:[%s385 + $0x64] sm:$0xf]
        %v404 = vld [vmem:[%s385 + $0x6c] sm:$0xf]
        %v405 = vld [vmem:[%s385 + $0x70] sm:$0xf]
        %v406 = vld [vmem:[%s385 + $0x78] sm:$0xf]
        %v407 = vld [vmem:[%s385 + $0x7c] sm:$0xf]
        %v408 = vld [vmem:[%s385 + $0x84] sm:$0xf]
        %v409 = vld [vmem:[%s385 + $0x88] sm:$0xf]
        %v410 = vld [vmem:[%s385 + $0x90] sm:$0xf]
        %v411 = vld [vmem:[%s385 + $0x94] sm:$0xf]
        %v412 = vld [vmem:[%s385 + $0x9c] sm:$0xf]
        %v413 = vld [vmem:[%s385 + $0xa0] sm:$0xf]
        %v414 = vld [vmem:[%s385 + $0xa8] sm:$0xf]
        %v415 = vld [vmem:[%s385 + $0xac] sm:$0xf]
        %v416 = vld [vmem:[%s385 + $0xb4] sm:$0xf]
        %v417 = vld [vmem:[%s385 + $0xb8] sm:$0xf]
        %v418 = vld [vmem:[%s385 + $0x8] sm:$0x1]
        %v419 = vld [vmem:[%s385 + $0x14] sm:$0x1]
        %v420 = vld [vmem:[%s385 + $0x20] sm:$0x1]
        %v421 = vld [vmem:[%s385 + $0x2c] sm:$0x1]
        %v422 = vld [vmem:[%s385 + $0x38] sm:$0x1]
        %v423 = vld [vmem:[%s385 + $0x44] sm:$0x1]
        %v424 = vld [vmem:[%s385 + $0x50] sm:$0x1]
        %v425 = vld [vmem:[%s385 + $0x5c] sm:$0x1]
        %v426 = vld [vmem:[%s385 + $0x68] sm:$0x1]
        %v427 = vld [vmem:[%s385 + $0x74] sm:$0x1]
        %v428 = vld [vmem:[%s385 + $0x80] sm:$0x1]
        %v429 = vld [vmem:[%s385 + $0x8c] sm:$0x1]
        %v430 = vld [vmem:[%s385 + $0x98] sm:$0x1]
        %v431 = vld [vmem:[%s385 + $0xa4] sm:$0x1]
        %v432 = vld [vmem:[%s385 + $0xb0] sm:$0x1]
        %v433 = vld [vmem:[%s385 + $0xbc] sm:$0x1]
        %v434 = vld [vmem:[%s385] sm:$0xe]
        %v435 = vld [vmem:[%s385 + $0xc] sm:$0xe]
        %v436 = vld [vmem:[%s385 + $0x18] sm:$0xe]
        %v437 = vld [vmem:[%s385 + $0x24] sm:$0xe]
        %v438 = vld [vmem:[%s385 + $0x30] sm:$0xe]
        %v439 = vld [vmem:[%s385 + $0x3c] sm:$0xe]
        %v440 = vld [vmem:[%s385 + $0x48] sm:$0xe]
        %v441 = vld [vmem:[%s385 + $0x54] sm:$0xe]
        %v442 = vld [vmem:[%s385 + $0x60] sm:$0xe]
        %v443 = vld [vmem:[%s385 + $0x6c] sm:$0xe]
        %v444 = vld [vmem:[%s385 + $0x78] sm:$0xe]
        %v445 = vld [vmem:[%s385 + $0x84] sm:$0xe]
        %v446 = vld [vmem:[%s385 + $0x90] sm:$0xe]
        %v447 = vld [vmem:[%s385 + $0x9c] sm:$0xe]
        %v448 = vld [vmem:[%s385 + $0xa8] sm:$0xe]
        %v449 = vld [vmem:[%s385 + $0xb4] sm:$0xe]
        %v482 = vunpack.c.l.b16 %v256
        %v483 = vunpack.c.l.b16 %v257
        %v484 = vunpack.c.l.b16 %v258
        %v485 = vunpack.c.l.b16 %v259
        %v486 = vunpack.c.l.b16 %v260
        %v487 = vunpack.c.l.b16 %v261
        %v488 = vunpack.c.l.b16 %v262
        %v489 = vunpack.c.l.b16 %v263
        %v490 = vunpack.c.l.b16 %v264
        %v491 = vunpack.c.l.b16 %v265
        %v492 = vunpack.c.l.b16 %v266
        %v493 = vunpack.c.l.b16 %v267
        %v494 = vunpack.c.l.b16 %v268
        %v495 = vunpack.c.l.b16 %v269
        %v496 = vunpack.c.l.b16 %v270
        %v497 = vunpack.c.l.b16 %v271
        %v498 = vunpack.c.l.b16 %v272
        %v499 = vunpack.c.l.b16 %v273
        %v500 = vunpack.c.l.b16 %v274
        %v501 = vunpack.c.l.b16 %v275
        %v502 = vunpack.c.l.b16 %v276
        %v503 = vunpack.c.l.b16 %v277
        %v504 = vunpack.c.l.b16 %v278
        %v505 = vunpack.c.l.b16 %v279
        %v506 = vunpack.c.l.b16 %v280
        %v507 = vunpack.c.l.b16 %v281
        %v508 = vunpack.c.l.b16 %v282
        %v509 = vunpack.c.l.b16 %v283
        %v510 = vunpack.c.l.b16 %v284
        %v511 = vunpack.c.l.b16 %v285
        %v512 = vunpack.c.l.b16 %v286
        %v513 = vunpack.c.l.b16 %v287
        %v514 = vpack.c.b16 %v483, %v482
        %v515 = vpack.c.b16 %v485, %v484
        %v516 = vpack.c.b16 %v487, %v486
        %v517 = vpack.c.b16 %v489, %v488
        %v518 = vpack.c.b16 %v491, %v490
        %v519 = vpack.c.b16 %v493, %v492
        %v520 = vpack.c.b16 %v495, %v494
        %v521 = vpack.c.b16 %v497, %v496
        %v522 = vpack.c.b16 %v499, %v498
        %v523 = vpack.c.b16 %v501, %v500
        %v524 = vpack.c.b16 %v503, %v502
        %v525 = vpack.c.b16 %v505, %v504
        %v526 = vpack.c.b16 %v507, %v506
        %v527 = vpack.c.b16 %v509, %v508
        %v528 = vpack.c.b16 %v511, %v510
        %v529 = vpack.c.b16 %v513, %v512
        %v546 = vunpack.c.l.b16 %v288
        %v547 = vunpack.c.l.b16 %v289
        %v548 = vunpack.c.l.b16 %v290
        %v549 = vunpack.c.l.b16 %v291
        %v550 = vunpack.c.l.b16 %v292
        %v551 = vunpack.c.l.b16 %v293
        %v552 = vunpack.c.l.b16 %v294
        %v553 = vunpack.c.l.b16 %v295
        %v554 = vunpack.c.l.b16 %v296
        %v555 = vunpack.c.l.b16 %v297
        %v556 = vunpack.c.l.b16 %v298
        %v557 = vunpack.c.l.b16 %v299
        %v558 = vunpack.c.l.b16 %v300
        %v559 = vunpack.c.l.b16 %v301
        %v560 = vunpack.c.l.b16 %v302
        %v561 = vunpack.c.l.b16 %v303
        %v562 = vpack.c.b16 %v546, %v546
        %v563 = vpack.c.b16 %v547, %v547
        %v564 = vpack.c.b16 %v548, %v548
        %v565 = vpack.c.b16 %v549, %v549
        %v566 = vpack.c.b16 %v550, %v550
        %v567 = vpack.c.b16 %v551, %v551
        %v568 = vpack.c.b16 %v552, %v552
        %v569 = vpack.c.b16 %v553, %v553
        %v570 = vpack.c.b16 %v554, %v554
        %v571 = vpack.c.b16 %v555, %v555
        %v572 = vpack.c.b16 %v556, %v556
        %v573 = vpack.c.b16 %v557, %v557
        %v574 = vpack.c.b16 %v558, %v558
        %v575 = vpack.c.b16 %v559, %v559
        %v576 = vpack.c.b16 %v560, %v560
        %v577 = vpack.c.b16 %v561, %v561
        %vm578 = vsmask.f32 7424
        %v580 = vshrl.u32 %v514, 16
        %v582 = vshll.u32 %v514, 16
        %v584 = vrot.slane %v582, 1
        %v585 = vor.u32 %v580, %v584
        %v587 = vshll.u32 %v562, 16
        %v589 = vrot.slane %v587, 1
        %v590 = vsel %vm578, %v585, %v589
        %v592 = vshrl.u32 %v515, 16
        %v594 = vshll.u32 %v515, 16
        %v596 = vrot.slane %v594, 1
        %v597 = vor.u32 %v592, %v596
        %v599 = vshll.u32 %v563, 16
        %v601 = vrot.slane %v599, 1
        %v602 = vsel %vm578, %v597, %v601
        %v604 = vshrl.u32 %v516, 16
        %v606 = vshll.u32 %v516, 16
        %v608 = vrot.slane %v606, 1
        %v609 = vor.u32 %v604, %v608
        %v611 = vshll.u32 %v564, 16
        %v613 = vrot.slane %v611, 1
        %v614 = vsel %vm578, %v609, %v613
        %v616 = vshrl.u32 %v517, 16
        %v618 = vshll.u32 %v517, 16
        %v620 = vrot.slane %v618, 1
        %v621 = vor.u32 %v616, %v620
        %v623 = vshll.u32 %v565, 16
        %v625 = vrot.slane %v623, 1
        %v626 = vsel %vm578, %v621, %v625
        %v628 = vshrl.u32 %v518, 16
        %v630 = vshll.u32 %v518, 16
        %v632 = vrot.slane %v630, 1
        %v633 = vor.u32 %v628, %v632
        %v635 = vshll.u32 %v566, 16
        %v637 = vrot.slane %v635, 1
        %v638 = vsel %vm578, %v633, %v637
        %v640 = vshrl.u32 %v519, 16
        %v642 = vshll.u32 %v519, 16
        %v644 = vrot.slane %v642, 1
        %v645 = vor.u32 %v640, %v644
        %v647 = vshll.u32 %v567, 16
        %v649 = vrot.slane %v647, 1
        %v650 = vsel %vm578, %v645, %v649
        %v652 = vshrl.u32 %v520, 16
        %v654 = vshll.u32 %v520, 16
        %v656 = vrot.slane %v654, 1
        %v657 = vor.u32 %v652, %v656
        %v659 = vshll.u32 %v568, 16
        %v661 = vrot.slane %v659, 1
        %v662 = vsel %vm578, %v657, %v661
        %v664 = vshrl.u32 %v521, 16
        %v666 = vshll.u32 %v521, 16
        %v668 = vrot.slane %v666, 1
        %v669 = vor.u32 %v664, %v668
        %v671 = vshll.u32 %v569, 16
        %v673 = vrot.slane %v671, 1
        %v674 = vsel %vm578, %v669, %v673
        %v676 = vshrl.u32 %v522, 16
        %v678 = vshll.u32 %v522, 16
        %v680 = vrot.slane %v678, 1
        %v681 = vor.u32 %v676, %v680
        %v683 = vshll.u32 %v570, 16
        %v685 = vrot.slane %v683, 1
        %v686 = vsel %vm578, %v681, %v685
        %v688 = vshrl.u32 %v523, 16
        %v690 = vshll.u32 %v523, 16
        %v692 = vrot.slane %v690, 1
        %v693 = vor.u32 %v688, %v692
        %v695 = vshll.u32 %v571, 16
        %v697 = vrot.slane %v695, 1
        %v698 = vsel %vm578, %v693, %v697
        %v700 = vshrl.u32 %v524, 16
        %v702 = vshll.u32 %v524, 16
        %v704 = vrot.slane %v702, 1
        %v705 = vor.u32 %v700, %v704
        %v707 = vshll.u32 %v572, 16
        %v709 = vrot.slane %v707, 1
        %v710 = vsel %vm578, %v705, %v709
        %v712 = vshrl.u32 %v525, 16
        %v714 = vshll.u32 %v525, 16
        %v716 = vrot.slane %v714, 1
        %v717 = vor.u32 %v712, %v716
        %v719 = vshll.u32 %v573, 16
        %v721 = vrot.slane %v719, 1
        %v722 = vsel %vm578, %v717, %v721
        %v724 = vshrl.u32 %v526, 16
        %v726 = vshll.u32 %v526, 16
        %v728 = vrot.slane %v726, 1
        %v729 = vor.u32 %v724, %v728
        %v731 = vshll.u32 %v574, 16
        %v733 = vrot.slane %v731, 1
        %v734 = vsel %vm578, %v729, %v733
        %v736 = vshrl.u32 %v527, 16
        %v738 = vshll.u32 %v527, 16
        %v740 = vrot.slane %v738, 1
        %v741 = vor.u32 %v736, %v740
        %v743 = vshll.u32 %v575, 16
        %v745 = vrot.slane %v743, 1
        %v746 = vsel %vm578, %v741, %v745
        %v748 = vshrl.u32 %v528, 16
        %v750 = vshll.u32 %v528, 16
        %v752 = vrot.slane %v750, 1
        %v753 = vor.u32 %v748, %v752
        %v755 = vshll.u32 %v576, 16
        %v757 = vrot.slane %v755, 1
        %v758 = vsel %vm578, %v753, %v757
        %v760 = vshrl.u32 %v529, 16
        %v762 = vshll.u32 %v529, 16
        %v764 = vrot.slane %v762, 1
        %v765 = vor.u32 %v760, %v764
        %v767 = vshll.u32 %v577, 16
        %v769 = vrot.slane %v767, 1
        %v770 = vsel %vm578, %v765, %v769
        %771 = vrot.lane.b32.xlu0 %v590, 4
        %v772 = vpop.permute.xlu0 %771
        %773 = vrot.lane.b32.xlu0 %v602, 4
        %v774 = vpop.permute.xlu0 %773
        %775 = vrot.lane.b32.xlu0 %v614, 4
        %v776 = vpop.permute.xlu0 %775
        %777 = vrot.lane.b32.xlu0 %v626, 4
        %v778 = vpop.permute.xlu0 %777
        %779 = vrot.lane.b32.xlu0 %v638, 4
        %v780 = vpop.permute.xlu0 %779
        %781 = vrot.lane.b32.xlu0 %v650, 4
        %v782 = vpop.permute.xlu0 %781
        %783 = vrot.lane.b32.xlu0 %v662, 4
        %v784 = vpop.permute.xlu0 %783
        %785 = vrot.lane.b32.xlu0 %v674, 4
        %v786 = vpop.permute.xlu0 %785
        %787 = vrot.lane.b32.xlu0 %v686, 4
        %v788 = vpop.permute.xlu0 %787
        %789 = vrot.lane.b32.xlu0 %v698, 4
        %v790 = vpop.permute.xlu0 %789
        %791 = vrot.lane.b32.xlu0 %v710, 4
        %v792 = vpop.permute.xlu0 %791
        %793 = vrot.lane.b32.xlu0 %v722, 4
        %v794 = vpop.permute.xlu0 %793
        %795 = vrot.lane.b32.xlu0 %v734, 4
        %v796 = vpop.permute.xlu0 %795
        %797 = vrot.lane.b32.xlu0 %v746, 4
        %v798 = vpop.permute.xlu0 %797
        %799 = vrot.lane.b32.xlu0 %v758, 4
        %v800 = vpop.permute.xlu0 %799
        %801 = vrot.lane.b32.xlu0 %v770, 4
        %v802 = vpop.permute.xlu0 %801
        %v819 = vunpack.c.l.b16 %v304
        %v820 = vunpack.c.l.b16 %v305
        %v821 = vunpack.c.l.b16 %v306
        %v822 = vunpack.c.l.b16 %v307
        %v823 = vunpack.c.l.b16 %v308
        %v824 = vunpack.c.l.b16 %v309
        %v825 = vunpack.c.l.b16 %v310
        %v826 = vunpack.c.l.b16 %v311
        %v827 = vunpack.c.l.b16 %v312
        %v828 = vunpack.c.l.b16 %v313
        %v829 = vunpack.c.l.b16 %v314
        %v830 = vunpack.c.l.b16 %v315
        %v831 = vunpack.c.l.b16 %v316
        %v832 = vunpack.c.l.b16 %v317
        %v833 = vunpack.c.l.b16 %v318
        %v834 = vunpack.c.l.b16 %v319
        %v835 = vpack.c.b16 %v483, %v819
        %v836 = vpack.c.b16 %v485, %v820
        %v837 = vpack.c.b16 %v487, %v821
        %v838 = vpack.c.b16 %v489, %v822
        %v839 = vpack.c.b16 %v491, %v823
        %v840 = vpack.c.b16 %v493, %v824
        %v841 = vpack.c.b16 %v495, %v825
        %v842 = vpack.c.b16 %v497, %v826
        %v843 = vpack.c.b16 %v499, %v827
        %v844 = vpack.c.b16 %v501, %v828
        %v845 = vpack.c.b16 %v503, %v829
        %v846 = vpack.c.b16 %v505, %v830
        %v847 = vpack.c.b16 %v507, %v831
        %v848 = vpack.c.b16 %v509, %v832
        %v849 = vpack.c.b16 %v511, %v833
        %v850 = vpack.c.b16 %v513, %v834
        %vm851 = vcmask 1046528
        %v852 = vrot.slane %v835, 1
        %v853 = vrot.slane %v562, 1
        %v854 = vsel %vm851, %v852, %v853
        %v855 = vrot.slane %v836, 1
        %v856 = vrot.slane %v563, 1
        %v857 = vsel %vm851, %v855, %v856
        %v858 = vrot.slane %v837, 1
        %v859 = vrot.slane %v564, 1
        %v860 = vsel %vm851, %v858, %v859
        %v861 = vrot.slane %v838, 1
        %v862 = vrot.slane %v565, 1
        %v863 = vsel %vm851, %v861, %v862
        %v864 = vrot.slane %v839, 1
        %v865 = vrot.slane %v566, 1
        %v866 = vsel %vm851, %v864, %v865
        %v867 = vrot.slane %v840, 1
        %v868 = vrot.slane %v567, 1
        %v869 = vsel %vm851, %v867, %v868
        %v870 = vrot.slane %v841, 1
        %v871 = vrot.slane %v568, 1
        %v872 = vsel %vm851, %v870, %v871
        %v873 = vrot.slane %v842, 1
        %v874 = vrot.slane %v569, 1
        %v875 = vsel %vm851, %v873, %v874
        %v876 = vrot.slane %v843, 1
        %v877 = vrot.slane %v570, 1
        %v878 = vsel %vm851, %v876, %v877
        %v879 = vrot.slane %v844, 1
        %v880 = vrot.slane %v571, 1
        %v881 = vsel %vm851, %v879, %v880
        %v882 = vrot.slane %v845, 1
        %v883 = vrot.slane %v572, 1
        %v884 = vsel %vm851, %v882, %v883
        %v885 = vrot.slane %v846, 1
        %v886 = vrot.slane %v573, 1
        %v887 = vsel %vm851, %v885, %v886
        %v888 = vrot.slane %v847, 1
        %v889 = vrot.slane %v574, 1
        %v890 = vsel %vm851, %v888, %v889
        %v891 = vrot.slane %v848, 1
        %v892 = vrot.slane %v575, 1
        %v893 = vsel %vm851, %v891, %v892
        %v894 = vrot.slane %v849, 1
        %v895 = vrot.slane %v576, 1
        %v896 = vsel %vm851, %v894, %v895
        %v897 = vrot.slane %v850, 1
        %v898 = vrot.slane %v577, 1
        %v899 = vsel %vm851, %v897, %v898
        %900 = vrot.lane.b32.xlu0 %v854, 8
        %v901 = vpop.permute.xlu0 %900
        %902 = vrot.lane.b32.xlu0 %v857, 8
        %v903 = vpop.permute.xlu0 %902
        %904 = vrot.lane.b32.xlu0 %v860, 8
        %v905 = vpop.permute.xlu0 %904
        %906 = vrot.lane.b32.xlu0 %v863, 8
        %v907 = vpop.permute.xlu0 %906
        %908 = vrot.lane.b32.xlu0 %v866, 8
        %v909 = vpop.permute.xlu0 %908
        %910 = vrot.lane.b32.xlu0 %v869, 8
        %v911 = vpop.permute.xlu0 %910
        %912 = vrot.lane.b32.xlu0 %v872, 8
        %v913 = vpop.permute.xlu0 %912
        %914 = vrot.lane.b32.xlu0 %v875, 8
        %v915 = vpop.permute.xlu0 %914
        %916 = vrot.lane.b32.xlu0 %v878, 8
        %v917 = vpop.permute.xlu0 %916
        %918 = vrot.lane.b32.xlu0 %v881, 8
        %v919 = vpop.permute.xlu0 %918
        %920 = vrot.lane.b32.xlu0 %v884, 8
        %v921 = vpop.permute.xlu0 %920
        %922 = vrot.lane.b32.xlu0 %v887, 8
        %v923 = vpop.permute.xlu0 %922
        %924 = vrot.lane.b32.xlu0 %v890, 8
        %v925 = vpop.permute.xlu0 %924
        %926 = vrot.lane.b32.xlu0 %v893, 8
        %v927 = vpop.permute.xlu0 %926
        %928 = vrot.lane.b32.xlu0 %v896, 8
        %v929 = vpop.permute.xlu0 %928
        %930 = vrot.lane.b32.xlu0 %v899, 8
        %v931 = vpop.permute.xlu0 %930
        %v964 = vunpack.c.l.b16 %v321
        %v965 = vunpack.c.l.b16 %v322
        %v966 = vunpack.c.l.b16 %v323
        %v967 = vunpack.c.l.b16 %v324
        %v968 = vunpack.c.l.b16 %v325
        %v969 = vunpack.c.l.b16 %v326
        %v970 = vunpack.c.l.b16 %v327
        %v971 = vunpack.c.l.b16 %v328
        %v972 = vunpack.c.l.b16 %v329
        %v973 = vunpack.c.l.b16 %v330
        %v974 = vunpack.c.l.b16 %v331
        %v975 = vunpack.c.l.b16 %v332
        %v976 = vunpack.c.l.b16 %v333
        %v977 = vunpack.c.l.b16 %v334
        %v978 = vunpack.c.l.b16 %v335
        %v979 = vunpack.c.l.b16 %v336
        %v980 = vunpack.c.l.b16 %v337
        %v981 = vunpack.c.l.b16 %v338
        %v982 = vunpack.c.l.b16 %v339
        %v983 = vunpack.c.l.b16 %v340
        %v984 = vunpack.c.l.b16 %v341
        %v985 = vunpack.c.l.b16 %v342
        %v986 = vunpack.c.l.b16 %v343
        %v987 = vunpack.c.l.b16 %v344
        %v988 = vunpack.c.l.b16 %v345
        %v989 = vunpack.c.l.b16 %v346
        %v990 = vunpack.c.l.b16 %v347
        %v991 = vunpack.c.l.b16 %v348
        %v992 = vunpack.c.l.b16 %v349
        %v993 = vunpack.c.l.b16 %v350
        %v994 = vunpack.c.l.b16 %v351
        %v995 = vunpack.c.l.b16 %v352
        %v996 = vpack.c.b16 %v965, %v964
        %v997 = vpack.c.b16 %v967, %v966
        %v998 = vpack.c.b16 %v969, %v968
        %v999 = vpack.c.b16 %v971, %v970
        %v1000 = vpack.c.b16 %v973, %v972
        %v1001 = vpack.c.b16 %v975, %v974
        %v1002 = vpack.c.b16 %v977, %v976
        %v1003 = vpack.c.b16 %v979, %v978
        %v1004 = vpack.c.b16 %v981, %v980
        %v1005 = vpack.c.b16 %v983, %v982
        %v1006 = vpack.c.b16 %v985, %v984
        %v1007 = vpack.c.b16 %v987, %v986
        %v1008 = vpack.c.b16 %v989, %v988
        %v1009 = vpack.c.b16 %v991, %v990
        %v1010 = vpack.c.b16 %v993, %v992
        %v1011 = vpack.c.b16 %v995, %v994
        %1012 = vrot.lane.b32.xlu0 %v996, 12
        %v1013 = vpop.permute.xlu0 %1012
        %1014 = vrot.lane.b32.xlu0 %v997, 12
        %v1015 = vpop.permute.xlu0 %1014
        %1016 = vrot.lane.b32.xlu0 %v998, 12
        %v1017 = vpop.permute.xlu0 %1016
        %1018 = vrot.lane.b32.xlu0 %v999, 12
        %v1019 = vpop.permute.xlu0 %1018
        %1020 = vrot.lane.b32.xlu0 %v1000, 12
        %v1021 = vpop.permute.xlu0 %1020
        %1022 = vrot.lane.b32.xlu0 %v1001, 12
        %v1023 = vpop.permute.xlu0 %1022
        %1024 = vrot.lane.b32.xlu0 %v1002, 12
        %v1025 = vpop.permute.xlu0 %1024
        %1026 = vrot.lane.b32.xlu0 %v1003, 12
        %v1027 = vpop.permute.xlu0 %1026
        %1028 = vrot.lane.b32.xlu0 %v1004, 12
        %v1029 = vpop.permute.xlu0 %1028
        %1030 = vrot.lane.b32.xlu0 %v1005, 12
        %v1031 = vpop.permute.xlu0 %1030
        %1032 = vrot.lane.b32.xlu0 %v1006, 12
        %v1033 = vpop.permute.xlu0 %1032
        %1034 = vrot.lane.b32.xlu0 %v1007, 12
        %v1035 = vpop.permute.xlu0 %1034
        %1036 = vrot.lane.b32.xlu0 %v1008, 12
        %v1037 = vpop.permute.xlu0 %1036
        %1038 = vrot.lane.b32.xlu0 %v1009, 12
        %v1039 = vpop.permute.xlu0 %1038
        %1040 = vrot.lane.b32.xlu0 %v1010, 12
        %v1041 = vpop.permute.xlu0 %1040
        %1042 = vrot.lane.b32.xlu0 %v1011, 12
        %v1043 = vpop.permute.xlu0 %1042
        %v1060 = vunpack.c.l.b16 %v353
        %v1061 = vunpack.c.l.b16 %v354
        %v1062 = vunpack.c.l.b16 %v355
        %v1063 = vunpack.c.l.b16 %v356
        %v1064 = vunpack.c.l.b16 %v357
        %v1065 = vunpack.c.l.b16 %v358
        %v1066 = vunpack.c.l.b16 %v359
        %v1067 = vunpack.c.l.b16 %v360
        %v1068 = vunpack.c.l.b16 %v361
        %v1069 = vunpack.c.l.b16 %v362
        %v1070 = vunpack.c.l.b16 %v363
        %v1071 = vunpack.c.l.b16 %v364
        %v1072 = vunpack.c.l.b16 %v365
        %v1073 = vunpack.c.l.b16 %v366
        %v1074 = vunpack.c.l.b16 %v367
        %v1075 = vunpack.c.l.b16 %v368
        %v1076 = vpack.c.b16 %v1060, %v1060
        %v1077 = vpack.c.b16 %v1061, %v1061
        %v1078 = vpack.c.b16 %v1062, %v1062
        %v1079 = vpack.c.b16 %v1063, %v1063
        %v1080 = vpack.c.b16 %v1064, %v1064
        %v1081 = vpack.c.b16 %v1065, %v1065
        %v1082 = vpack.c.b16 %v1066, %v1066
        %v1083 = vpack.c.b16 %v1067, %v1067
        %v1084 = vpack.c.b16 %v1068, %v1068
        %v1085 = vpack.c.b16 %v1069, %v1069
        %v1086 = vpack.c.b16 %v1070, %v1070
        %v1087 = vpack.c.b16 %v1071, %v1071
        %v1088 = vpack.c.b16 %v1072, %v1072
        %v1089 = vpack.c.b16 %v1073, %v1073
        %v1090 = vpack.c.b16 %v1074, %v1074
        %v1091 = vpack.c.b16 %v1075, %v1075
        %v1093 = vshrl.u32 %v996, 16
        %v1095 = vshll.u32 %v996, 16
        %v1097 = vrot.slane %v1095, 1
        %v1098 = vor.u32 %v1093, %v1097
        %v1100 = vshll.u32 %v1076, 16
        %v1102 = vrot.slane %v1100, 1
        %v1103 = vsel %vm578, %v1098, %v1102
        %v1105 = vshrl.u32 %v997, 16
        %v1107 = vshll.u32 %v997, 16
        %v1109 = vrot.slane %v1107, 1
        %v1110 = vor.u32 %v1105, %v1109
        %v1112 = vshll.u32 %v1077, 16
        %v1114 = vrot.slane %v1112, 1
        %v1115 = vsel %vm578, %v1110, %v1114
        %v1117 = vshrl.u32 %v998, 16
        %v1119 = vshll.u32 %v998, 16
        %v1121 = vrot.slane %v1119, 1
        %v1122 = vor.u32 %v1117, %v1121
        %v1124 = vshll.u32 %v1078, 16
        %v1126 = vrot.slane %v1124, 1
        %v1127 = vsel %vm578, %v1122, %v1126
        %v1129 = vshrl.u32 %v999, 16
        %v1131 = vshll.u32 %v999, 16
        %v1133 = vrot.slane %v1131, 1
        %v1134 = vor.u32 %v1129, %v1133
        %v1136 = vshll.u32 %v1079, 16
        %v1138 = vrot.slane %v1136, 1
        %v1139 = vsel %vm578, %v1134, %v1138
        %v1141 = vshrl.u32 %v1000, 16
        %v1143 = vshll.u32 %v1000, 16
        %v1145 = vrot.slane %v1143, 1
        %v1146 = vor.u32 %v1141, %v1145
        %v1148 = vshll.u32 %v1080, 16
        %v1150 = vrot.slane %v1148, 1
        %v1151 = vsel %vm578, %v1146, %v1150
        %v1153 = vshrl.u32 %v1001, 16
        %v1155 = vshll.u32 %v1001, 16
        %v1157 = vrot.slane %v1155, 1
        %v1158 = vor.u32 %v1153, %v1157
        %v1160 = vshll.u32 %v1081, 16
        %v1162 = vrot.slane %v1160, 1
        %v1163 = vsel %vm578, %v1158, %v1162
        %v1165 = vshrl.u32 %v1002, 16
        %v1167 = vshll.u32 %v1002, 16
        %v1169 = vrot.slane %v1167, 1
        %v1170 = vor.u32 %v1165, %v1169
        %v1172 = vshll.u32 %v1082, 16
        %v1174 = vrot.slane %v1172, 1
        %v1175 = vsel %vm578, %v1170, %v1174
        %v1177 = vshrl.u32 %v1003, 16
        %v1179 = vshll.u32 %v1003, 16
        %v1181 = vrot.slane %v1179, 1
        %v1182 = vor.u32 %v1177, %v1181
        %v1184 = vshll.u32 %v1083, 16
        %v1186 = vrot.slane %v1184, 1
        %v1187 = vsel %vm578, %v1182, %v1186
        %v1189 = vshrl.u32 %v1004, 16
        %v1191 = vshll.u32 %v1004, 16
        %v1193 = vrot.slane %v1191, 1
        %v1194 = vor.u32 %v1189, %v1193
        %v1196 = vshll.u32 %v1084, 16
        %v1198 = vrot.slane %v1196, 1
        %v1199 = vsel %vm578, %v1194, %v1198
        %v1201 = vshrl.u32 %v1005, 16
        %v1203 = vshll.u32 %v1005, 16
        %v1205 = vrot.slane %v1203, 1
        %v1206 = vor.u32 %v1201, %v1205
        %v1208 = vshll.u32 %v1085, 16
        %v1210 = vrot.slane %v1208, 1
        %v1211 = vsel %vm578, %v1206, %v1210
        %v1213 = vshrl.u32 %v1006, 16
        %v1215 = vshll.u32 %v1006, 16
        %v1217 = vrot.slane %v1215, 1
        %v1218 = vor.u32 %v1213, %v1217
        %v1220 = vshll.u32 %v1086, 16
        %v1222 = vrot.slane %v1220, 1
        %v1223 = vsel %vm578, %v1218, %v1222
        %v1225 = vshrl.u32 %v1007, 16
        %v1227 = vshll.u32 %v1007, 16
        %v1229 = vrot.slane %v1227, 1
        %v1230 = vor.u32 %v1225, %v1229
        %v1232 = vshll.u32 %v1087, 16
        %v1234 = vrot.slane %v1232, 1
        %v1235 = vsel %vm578, %v1230, %v1234
        %v1237 = vshrl.u32 %v1008, 16
        %v1239 = vshll.u32 %v1008, 16
        %v1241 = vrot.slane %v1239, 1
        %v1242 = vor.u32 %v1237, %v1241
        %v1244 = vshll.u32 %v1088, 16
        %v1246 = vrot.slane %v1244, 1
        %v1247 = vsel %vm578, %v1242, %v1246
        %v1249 = vshrl.u32 %v1009, 16
        %v1251 = vshll.u32 %v1009, 16
        %v1253 = vrot.slane %v1251, 1
        %v1254 = vor.u32 %v1249, %v1253
        %v1256 = vshll.u32 %v1089, 16
        %v1258 = vrot.slane %v1256, 1
        %v1259 = vsel %vm578, %v1254, %v1258
        %v1261 = vshrl.u32 %v1010, 16
        %v1263 = vshll.u32 %v1010, 16
        %v1265 = vrot.slane %v1263, 1
        %v1266 = vor.u32 %v1261, %v1265
        %v1268 = vshll.u32 %v1090, 16
        %v1270 = vrot.slane %v1268, 1
        %v1271 = vsel %vm578, %v1266, %v1270
        %v1273 = vshrl.u32 %v1011, 16
        %v1275 = vshll.u32 %v1011, 16
        %v1277 = vrot.slane %v1275, 1
        %v1278 = vor.u32 %v1273, %v1277
        %v1280 = vshll.u32 %v1091, 16
        %v1282 = vrot.slane %v1280, 1
        %v1283 = vsel %vm578, %v1278, %v1282
        %1284 = vrot.lane.b32.xlu0 %v1103, 16
        %v1285 = vpop.permute.xlu0 %1284
        %1286 = vrot.lane.b32.xlu0 %v1115, 16
        %v1287 = vpop.permute.xlu0 %1286
        %1288 = vrot.lane.b32.xlu0 %v1127, 16
        %v1289 = vpop.permute.xlu0 %1288
        %1290 = vrot.lane.b32.xlu0 %v1139, 16
        %v1291 = vpop.permute.xlu0 %1290
        %1292 = vrot.lane.b32.xlu0 %v1151, 16
        %v1293 = vpop.permute.xlu0 %1292
        %1294 = vrot.lane.b32.xlu0 %v1163, 16
        %v1295 = vpop.permute.xlu0 %1294
        %1296 = vrot.lane.b32.xlu0 %v1175, 16
        %v1297 = vpop.permute.xlu0 %1296
        %1298 = vrot.lane.b32.xlu0 %v1187, 16
        %v1299 = vpop.permute.xlu0 %1298
        %1300 = vrot.lane.b32.xlu0 %v1199, 16
        %v1301 = vpop.permute.xlu0 %1300
        %1302 = vrot.lane.b32.xlu0 %v1211, 16
        %v1303 = vpop.permute.xlu0 %1302
        %1304 = vrot.lane.b32.xlu0 %v1223, 16
        %v1305 = vpop.permute.xlu0 %1304
        %1306 = vrot.lane.b32.xlu0 %v1235, 16
        %v1307 = vpop.permute.xlu0 %1306
        %1308 = vrot.lane.b32.xlu0 %v1247, 16
        %v1309 = vpop.permute.xlu0 %1308
        %1310 = vrot.lane.b32.xlu0 %v1259, 16
        %v1311 = vpop.permute.xlu0 %1310
        %1312 = vrot.lane.b32.xlu0 %v1271, 16
        %v1313 = vpop.permute.xlu0 %1312
        %1314 = vrot.lane.b32.xlu0 %v1283, 16
        %v1315 = vpop.permute.xlu0 %1314
        %v1332 = vunpack.c.l.b16 %v369
        %v1333 = vunpack.c.l.b16 %v370
        %v1334 = vunpack.c.l.b16 %v371
        %v1335 = vunpack.c.l.b16 %v372
        %v1336 = vunpack.c.l.b16 %v373
        %v1337 = vunpack.c.l.b16 %v374
        %v1338 = vunpack.c.l.b16 %v375
        %v1339 = vunpack.c.l.b16 %v376
        %v1340 = vunpack.c.l.b16 %v377
        %v1341 = vunpack.c.l.b16 %v378
        %v1342 = vunpack.c.l.b16 %v379
        %v1343 = vunpack.c.l.b16 %v380
        %v1344 = vunpack.c.l.b16 %v381
        %v1345 = vunpack.c.l.b16 %v382
        %v1346 = vunpack.c.l.b16 %v383
        %v1347 = vunpack.c.l.b16 %v384
        %v1348 = vpack.c.b16 %v965, %v1332
        %v1349 = vpack.c.b16 %v967, %v1333
        %v1350 = vpack.c.b16 %v969, %v1334
        %v1351 = vpack.c.b16 %v971, %v1335
        %v1352 = vpack.c.b16 %v973, %v1336
        %v1353 = vpack.c.b16 %v975, %v1337
        %v1354 = vpack.c.b16 %v977, %v1338
        %v1355 = vpack.c.b16 %v979, %v1339
        %v1356 = vpack.c.b16 %v981, %v1340
        %v1357 = vpack.c.b16 %v983, %v1341
        %v1358 = vpack.c.b16 %v985, %v1342
        %v1359 = vpack.c.b16 %v987, %v1343
        %v1360 = vpack.c.b16 %v989, %v1344
        %v1361 = vpack.c.b16 %v991, %v1345
        %v1362 = vpack.c.b16 %v993, %v1346
        %v1363 = vpack.c.b16 %v995, %v1347
        %v1364 = vrot.slane %v1348, 1
        %v1365 = vrot.slane %v1076, 1
        %v1366 = vsel %vm851, %v1364, %v1365
        %v1367 = vrot.slane %v1349, 1
        %v1368 = vrot.slane %v1077, 1
        %v1369 = vsel %vm851, %v1367, %v1368
        %v1370 = vrot.slane %v1350, 1
        %v1371 = vrot.slane %v1078, 1
        %v1372 = vsel %vm851, %v1370, %v1371
        %v1373 = vrot.slane %v1351, 1
        %v1374 = vrot.slane %v1079, 1
        %v1375 = vsel %vm851, %v1373, %v1374
        %v1376 = vrot.slane %v1352, 1
        %v1377 = vrot.slane %v1080, 1
        %v1378 = vsel %vm851, %v1376, %v1377
        %v1379 = vrot.slane %v1353, 1
        %v1380 = vrot.slane %v1081, 1
        %v1381 = vsel %vm851, %v1379, %v1380
        %v1382 = vrot.slane %v1354, 1
        %v1383 = vrot.slane %v1082, 1
        %v1384 = vsel %vm851, %v1382, %v1383
        %v1385 = vrot.slane %v1355, 1
        %v1386 = vrot.slane %v1083, 1
        %v1387 = vsel %vm851, %v1385, %v1386
        %v1388 = vrot.slane %v1356, 1
        %v1389 = vrot.slane %v1084, 1
        %v1390 = vsel %vm851, %v1388, %v1389
        %v1391 = vrot.slane %v1357, 1
        %v1392 = vrot.slane %v1085, 1
        %v1393 = vsel %vm851, %v1391, %v1392
        %v1394 = vrot.slane %v1358, 1
        %v1395 = vrot.slane %v1086, 1
        %v1396 = vsel %vm851, %v1394, %v1395
        %v1397 = vrot.slane %v1359, 1
        %v1398 = vrot.slane %v1087, 1
        %v1399 = vsel %vm851, %v1397, %v1398
        %v1400 = vrot.slane %v1360, 1
        %v1401 = vrot.slane %v1088, 1
        %v1402 = vsel %vm851, %v1400, %v1401
        %v1403 = vrot.slane %v1361, 1
        %v1404 = vrot.slane %v1089, 1
        %v1405 = vsel %vm851, %v1403, %v1404
        %v1406 = vrot.slane %v1362, 1
        %v1407 = vrot.slane %v1090, 1
        %v1408 = vsel %vm851, %v1406, %v1407
        %v1409 = vrot.slane %v1363, 1
        %v1410 = vrot.slane %v1091, 1
        %v1411 = vsel %vm851, %v1409, %v1410
        %1412 = vrot.lane.b32.xlu0 %v1366, 20
        %v1413 = vpop.permute.xlu0 %1412
        %1414 = vrot.lane.b32.xlu0 %v1369, 20
        %v1415 = vpop.permute.xlu0 %1414
        %1416 = vrot.lane.b32.xlu0 %v1372, 20
        %v1417 = vpop.permute.xlu0 %1416
        %1418 = vrot.lane.b32.xlu0 %v1375, 20
        %v1419 = vpop.permute.xlu0 %1418
        %1420 = vrot.lane.b32.xlu0 %v1378, 20
        %v1421 = vpop.permute.xlu0 %1420
        %1422 = vrot.lane.b32.xlu0 %v1381, 20
        %v1423 = vpop.permute.xlu0 %1422
        %1424 = vrot.lane.b32.xlu0 %v1384, 20
        %v1425 = vpop.permute.xlu0 %1424
        %1426 = vrot.lane.b32.xlu0 %v1387, 20
        %v1427 = vpop.permute.xlu0 %1426
        %1428 = vrot.lane.b32.xlu0 %v1390, 20
        %v1429 = vpop.permute.xlu0 %1428
        %1430 = vrot.lane.b32.xlu0 %v1393, 20
        %v1431 = vpop.permute.xlu0 %1430
        %1432 = vrot.lane.b32.xlu0 %v1396, 20
        %v1433 = vpop.permute.xlu0 %1432
        %1434 = vrot.lane.b32.xlu0 %v1399, 20
        %v1435 = vpop.permute.xlu0 %1434
        %1436 = vrot.lane.b32.xlu0 %v1402, 20
        %v1437 = vpop.permute.xlu0 %1436
        %1438 = vrot.lane.b32.xlu0 %v1405, 20
        %v1439 = vpop.permute.xlu0 %1438
        %1440 = vrot.lane.b32.xlu0 %v1408, 20
        %v1441 = vpop.permute.xlu0 %1440
        %1442 = vrot.lane.b32.xlu0 %v1411, 20
        %v1443 = vpop.permute.xlu0 %1442
        %v1476 = vunpack.c.l.b16 %v386
        %v1477 = vunpack.c.l.b16 %v387
        %v1478 = vunpack.c.l.b16 %v388
        %v1479 = vunpack.c.l.b16 %v389
        %v1480 = vunpack.c.l.b16 %v390
        %v1481 = vunpack.c.l.b16 %v391
        %v1482 = vunpack.c.l.b16 %v392
        %v1483 = vunpack.c.l.b16 %v393
        %v1484 = vunpack.c.l.b16 %v394
        %v1485 = vunpack.c.l.b16 %v395
        %v1486 = vunpack.c.l.b16 %v396
        %v1487 = vunpack.c.l.b16 %v397
        %v1488 = vunpack.c.l.b16 %v398
        %v1489 = vunpack.c.l.b16 %v399
        %v1490 = vunpack.c.l.b16 %v400
        %v1491 = vunpack.c.l.b16 %v401
        %v1492 = vunpack.c.l.b16 %v402
        %v1493 = vunpack.c.l.b16 %v403
        %v1494 = vunpack.c.l.b16 %v404
        %v1495 = vunpack.c.l.b16 %v405
        %v1496 = vunpack.c.l.b16 %v406
        %v1497 = vunpack.c.l.b16 %v407
        %v1498 = vunpack.c.l.b16 %v408
        %v1499 = vunpack.c.l.b16 %v409
        %v1500 = vunpack.c.l.b16 %v410
        %v1501 = vunpack.c.l.b16 %v411
        %v1502 = vunpack.c.l.b16 %v412
        %v1503 = vunpack.c.l.b16 %v413
        %v1504 = vunpack.c.l.b16 %v414
        %v1505 = vunpack.c.l.b16 %v415
        %v1506 = vunpack.c.l.b16 %v416
        %v1507 = vunpack.c.l.b16 %v417
        %v1508 = vpack.c.b16 %v1477, %v1476
        %v1509 = vpack.c.b16 %v1479, %v1478
        %v1510 = vpack.c.b16 %v1481, %v1480
        %v1511 = vpack.c.b16 %v1483, %v1482
        %v1512 = vpack.c.b16 %v1485, %v1484
        %v1513 = vpack.c.b16 %v1487, %v1486
        %v1514 = vpack.c.b16 %v1489, %v1488
        %v1515 = vpack.c.b16 %v1491, %v1490
        %v1516 = vpack.c.b16 %v1493, %v1492
        %v1517 = vpack.c.b16 %v1495, %v1494
        %v1518 = vpack.c.b16 %v1497, %v1496
        %v1519 = vpack.c.b16 %v1499, %v1498
        %v1520 = vpack.c.b16 %v1501, %v1500
        %v1521 = vpack.c.b16 %v1503, %v1502
        %v1522 = vpack.c.b16 %v1505, %v1504
        %v1523 = vpack.c.b16 %v1507, %v1506
        %1524 = vrot.lane.b32.xlu0 %v1508, 24
        %v1525 = vpop.permute.xlu0 %1524
        %1526 = vrot.lane.b32.xlu0 %v1509, 24
        %v1527 = vpop.permute.xlu0 %1526
        %1528 = vrot.lane.b32.xlu0 %v1510, 24
        %v1529 = vpop.permute.xlu0 %1528
        %1530 = vrot.lane.b32.xlu0 %v1511, 24
        %v1531 = vpop.permute.xlu0 %1530
        %1532 = vrot.lane.b32.xlu0 %v1512, 24
        %v1533 = vpop.permute.xlu0 %1532
        %1534 = vrot.lane.b32.xlu0 %v1513, 24
        %v1535 = vpop.permute.xlu0 %1534
        %1536 = vrot.lane.b32.xlu0 %v1514, 24
        %v1537 = vpop.permute.xlu0 %1536
        %1538 = vrot.lane.b32.xlu0 %v1515, 24
        %v1539 = vpop.permute.xlu0 %1538
        %1540 = vrot.lane.b32.xlu0 %v1516, 24
        %v1541 = vpop.permute.xlu0 %1540
        %1542 = vrot.lane.b32.xlu0 %v1517, 24
        %v1543 = vpop.permute.xlu0 %1542
        %1544 = vrot.lane.b32.xlu0 %v1518, 24
        %v1545 = vpop.permute.xlu0 %1544
        %1546 = vrot.lane.b32.xlu0 %v1519, 24
        %v1547 = vpop.permute.xlu0 %1546
        %1548 = vrot.lane.b32.xlu0 %v1520, 24
        %v1549 = vpop.permute.xlu0 %1548
        %1550 = vrot.lane.b32.xlu0 %v1521, 24
        %v1551 = vpop.permute.xlu0 %1550
        %1552 = vrot.lane.b32.xlu0 %v1522, 24
        %v1553 = vpop.permute.xlu0 %1552
        %1554 = vrot.lane.b32.xlu0 %v1523, 24
        %v1555 = vpop.permute.xlu0 %1554
        %v1572 = vunpack.c.l.b16 %v418
        %v1573 = vunpack.c.l.b16 %v419
        %v1574 = vunpack.c.l.b16 %v420
        %v1575 = vunpack.c.l.b16 %v421
        %v1576 = vunpack.c.l.b16 %v422
        %v1577 = vunpack.c.l.b16 %v423
        %v1578 = vunpack.c.l.b16 %v424
        %v1579 = vunpack.c.l.b16 %v425
        %v1580 = vunpack.c.l.b16 %v426
        %v1581 = vunpack.c.l.b16 %v427
        %v1582 = vunpack.c.l.b16 %v428
        %v1583 = vunpack.c.l.b16 %v429
        %v1584 = vunpack.c.l.b16 %v430
        %v1585 = vunpack.c.l.b16 %v431
        %v1586 = vunpack.c.l.b16 %v432
        %v1587 = vunpack.c.l.b16 %v433
        %v1588 = vpack.c.b16 %v1572, %v1572
        %v1589 = vpack.c.b16 %v1573, %v1573
        %v1590 = vpack.c.b16 %v1574, %v1574
        %v1591 = vpack.c.b16 %v1575, %v1575
        %v1592 = vpack.c.b16 %v1576, %v1576
        %v1593 = vpack.c.b16 %v1577, %v1577
        %v1594 = vpack.c.b16 %v1578, %v1578
        %v1595 = vpack.c.b16 %v1579, %v1579
        %v1596 = vpack.c.b16 %v1580, %v1580
        %v1597 = vpack.c.b16 %v1581, %v1581
        %v1598 = vpack.c.b16 %v1582, %v1582
        %v1599 = vpack.c.b16 %v1583, %v1583
        %v1600 = vpack.c.b16 %v1584, %v1584
        %v1601 = vpack.c.b16 %v1585, %v1585
        %v1602 = vpack.c.b16 %v1586, %v1586
        %v1603 = vpack.c.b16 %v1587, %v1587
        %v1605 = vshrl.u32 %v1508, 16
        %v1607 = vshll.u32 %v1508, 16
        %v1609 = vrot.slane %v1607, 1
        %v1610 = vor.u32 %v1605, %v1609
        %v1612 = vshll.u32 %v1588, 16
        %v1614 = vrot.slane %v1612, 1
        %v1615 = vsel %vm578, %v1610, %v1614
        %v1617 = vshrl.u32 %v1509, 16
        %v1619 = vshll.u32 %v1509, 16
        %v1621 = vrot.slane %v1619, 1
        %v1622 = vor.u32 %v1617, %v1621
        %v1624 = vshll.u32 %v1589, 16
        %v1626 = vrot.slane %v1624, 1
        %v1627 = vsel %vm578, %v1622, %v1626
        %v1629 = vshrl.u32 %v1510, 16
        %v1631 = vshll.u32 %v1510, 16
        %v1633 = vrot.slane %v1631, 1
        %v1634 = vor.u32 %v1629, %v1633
        %v1636 = vshll.u32 %v1590, 16
        %v1638 = vrot.slane %v1636, 1
        %v1639 = vsel %vm578, %v1634, %v1638
        %v1641 = vshrl.u32 %v1511, 16
        %v1643 = vshll.u32 %v1511, 16
        %v1645 = vrot.slane %v1643, 1
        %v1646 = vor.u32 %v1641, %v1645
        %v1648 = vshll.u32 %v1591, 16
        %v1650 = vrot.slane %v1648, 1
        %v1651 = vsel %vm578, %v1646, %v1650
        %v1653 = vshrl.u32 %v1512, 16
        %v1655 = vshll.u32 %v1512, 16
        %v1657 = vrot.slane %v1655, 1
        %v1658 = vor.u32 %v1653, %v1657
        %v1660 = vshll.u32 %v1592, 16
        %v1662 = vrot.slane %v1660, 1
        %v1663 = vsel %vm578, %v1658, %v1662
        %v1665 = vshrl.u32 %v1513, 16
        %v1667 = vshll.u32 %v1513, 16
        %v1669 = vrot.slane %v1667, 1
        %v1670 = vor.u32 %v1665, %v1669
        %v1672 = vshll.u32 %v1593, 16
        %v1674 = vrot.slane %v1672, 1
        %v1675 = vsel %vm578, %v1670, %v1674
        %v1677 = vshrl.u32 %v1514, 16
        %v1679 = vshll.u32 %v1514, 16
        %v1681 = vrot.slane %v1679, 1
        %v1682 = vor.u32 %v1677, %v1681
        %v1684 = vshll.u32 %v1594, 16
        %v1686 = vrot.slane %v1684, 1
        %v1687 = vsel %vm578, %v1682, %v1686
        %v1689 = vshrl.u32 %v1515, 16
        %v1691 = vshll.u32 %v1515, 16
        %v1693 = vrot.slane %v1691, 1
        %v1694 = vor.u32 %v1689, %v1693
        %v1696 = vshll.u32 %v1595, 16
        %v1698 = vrot.slane %v1696, 1
        %v1699 = vsel %vm578, %v1694, %v1698
        %v1701 = vshrl.u32 %v1516, 16
        %v1703 = vshll.u32 %v1516, 16
        %v1705 = vrot.slane %v1703, 1
        %v1706 = vor.u32 %v1701, %v1705
        %v1708 = vshll.u32 %v1596, 16
        %v1710 = vrot.slane %v1708, 1
        %v1711 = vsel %vm578, %v1706, %v1710
        %v1713 = vshrl.u32 %v1517, 16
        %v1715 = vshll.u32 %v1517, 16
        %v1717 = vrot.slane %v1715, 1
        %v1718 = vor.u32 %v1713, %v1717
        %v1720 = vshll.u32 %v1597, 16
        %v1722 = vrot.slane %v1720, 1
        %v1723 = vsel %vm578, %v1718, %v1722
        %v1725 = vshrl.u32 %v1518, 16
        %v1727 = vshll.u32 %v1518, 16
        %v1729 = vrot.slane %v1727, 1
        %v1730 = vor.u32 %v1725, %v1729
        %v1732 = vshll.u32 %v1598, 16
        %v1734 = vrot.slane %v1732, 1
        %v1735 = vsel %vm578, %v1730, %v1734
        %v1737 = vshrl.u32 %v1519, 16
        %v1739 = vshll.u32 %v1519, 16
        %v1741 = vrot.slane %v1739, 1
        %v1742 = vor.u32 %v1737, %v1741
        %v1744 = vshll.u32 %v1599, 16
        %v1746 = vrot.slane %v1744, 1
        %v1747 = vsel %vm578, %v1742, %v1746
        %v1749 = vshrl.u32 %v1520, 16
        %v1751 = vshll.u32 %v1520, 16
        %v1753 = vrot.slane %v1751, 1
        %v1754 = vor.u32 %v1749, %v1753
        %v1756 = vshll.u32 %v1600, 16
        %v1758 = vrot.slane %v1756, 1
        %v1759 = vsel %vm578, %v1754, %v1758
        %v1761 = vshrl.u32 %v1521, 16
        %v1763 = vshll.u32 %v1521, 16
        %v1765 = vrot.slane %v1763, 1
        %v1766 = vor.u32 %v1761, %v1765
        %v1768 = vshll.u32 %v1601, 16
        %v1770 = vrot.slane %v1768, 1
        %v1771 = vsel %vm578, %v1766, %v1770
        %v1773 = vshrl.u32 %v1522, 16
        %v1775 = vshll.u32 %v1522, 16
        %v1777 = vrot.slane %v1775, 1
        %v1778 = vor.u32 %v1773, %v1777
        %v1780 = vshll.u32 %v1602, 16
        %v1782 = vrot.slane %v1780, 1
        %v1783 = vsel %vm578, %v1778, %v1782
        %v1785 = vshrl.u32 %v1523, 16
        %v1787 = vshll.u32 %v1523, 16
        %v1789 = vrot.slane %v1787, 1
        %v1790 = vor.u32 %v1785, %v1789
        %v1792 = vshll.u32 %v1603, 16
        %v1794 = vrot.slane %v1792, 1
        %v1795 = vsel %vm578, %v1790, %v1794
        %1796 = vrot.lane.b32.xlu0 %v1615, 28
        %v1797 = vpop.permute.xlu0 %1796
        %1798 = vrot.lane.b32.xlu0 %v1627, 28
        %v1799 = vpop.permute.xlu0 %1798
        %1800 = vrot.lane.b32.xlu0 %v1639, 28
        %v1801 = vpop.permute.xlu0 %1800
        %1802 = vrot.lane.b32.xlu0 %v1651, 28
        %v1803 = vpop.permute.xlu0 %1802
        %1804 = vrot.lane.b32.xlu0 %v1663, 28
        %v1805 = vpop.permute.xlu0 %1804
        %1806 = vrot.lane.b32.xlu0 %v1675, 28
        %v1807 = vpop.permute.xlu0 %1806
        %1808 = vrot.lane.b32.xlu0 %v1687, 28
        %v1809 = vpop.permute.xlu0 %1808
        %1810 = vrot.lane.b32.xlu0 %v1699, 28
        %v1811 = vpop.permute.xlu0 %1810
        %1812 = vrot.lane.b32.xlu0 %v1711, 28
        %v1813 = vpop.permute.xlu0 %1812
        %1814 = vrot.lane.b32.xlu0 %v1723, 28
        %v1815 = vpop.permute.xlu0 %1814
        %1816 = vrot.lane.b32.xlu0 %v1735, 28
        %v1817 = vpop.permute.xlu0 %1816
        %1818 = vrot.lane.b32.xlu0 %v1747, 28
        %v1819 = vpop.permute.xlu0 %1818
        %1820 = vrot.lane.b32.xlu0 %v1759, 28
        %v1821 = vpop.permute.xlu0 %1820
        %1822 = vrot.lane.b32.xlu0 %v1771, 28
        %v1823 = vpop.permute.xlu0 %1822
        %1824 = vrot.lane.b32.xlu0 %v1783, 28
        %v1825 = vpop.permute.xlu0 %1824
        %1826 = vrot.lane.b32.xlu0 %v1795, 28
        %v1827 = vpop.permute.xlu0 %1826
        %v1844 = vunpack.c.l.b16 %v434
        %v1845 = vunpack.c.l.b16 %v435
        %v1846 = vunpack.c.l.b16 %v436
        %v1847 = vunpack.c.l.b16 %v437
        %v1848 = vunpack.c.l.b16 %v438
        %v1849 = vunpack.c.l.b16 %v439
        %v1850 = vunpack.c.l.b16 %v440
        %v1851 = vunpack.c.l.b16 %v441
        %v1852 = vunpack.c.l.b16 %v442
        %v1853 = vunpack.c.l.b16 %v443
        %v1854 = vunpack.c.l.b16 %v444
        %v1855 = vunpack.c.l.b16 %v445
        %v1856 = vunpack.c.l.b16 %v446
        %v1857 = vunpack.c.l.b16 %v447
        %v1858 = vunpack.c.l.b16 %v448
        %v1859 = vunpack.c.l.b16 %v449
        %v1860 = vpack.c.b16 %v1477, %v1844
        %v1861 = vpack.c.b16 %v1479, %v1845
        %v1862 = vpack.c.b16 %v1481, %v1846
        %v1863 = vpack.c.b16 %v1483, %v1847
        %v1864 = vpack.c.b16 %v1485, %v1848
        %v1865 = vpack.c.b16 %v1487, %v1849
        %v1866 = vpack.c.b16 %v1489, %v1850
        %v1867 = vpack.c.b16 %v1491, %v1851
        %v1868 = vpack.c.b16 %v1493, %v1852
        %v1869 = vpack.c.b16 %v1495, %v1853
        %v1870 = vpack.c.b16 %v1497, %v1854
        %v1871 = vpack.c.b16 %v1499, %v1855
        %v1872 = vpack.c.b16 %v1501, %v1856
        %v1873 = vpack.c.b16 %v1503, %v1857
        %v1874 = vpack.c.b16 %v1505, %v1858
        %v1875 = vpack.c.b16 %v1507, %v1859
        %v1876 = vrot.slane %v1860, 1
        %v1877 = vrot.slane %v1588, 1
        %v1878 = vsel %vm851, %v1876, %v1877
        %v1879 = vrot.slane %v1861, 1
        %v1880 = vrot.slane %v1589, 1
        %v1881 = vsel %vm851, %v1879, %v1880
        %v1882 = vrot.slane %v1862, 1
        %v1883 = vrot.slane %v1590, 1
        %v1884 = vsel %vm851, %v1882, %v1883
        %v1885 = vrot.slane %v1863, 1
        %v1886 = vrot.slane %v1591, 1
        %v1887 = vsel %vm851, %v1885, %v1886
        %v1888 = vrot.slane %v1864, 1
        %v1889 = vrot.slane %v1592, 1
        %v1890 = vsel %vm851, %v1888, %v1889
        %v1891 = vrot.slane %v1865, 1
        %v1892 = vrot.slane %v1593, 1
        %v1893 = vsel %vm851, %v1891, %v1892
        %v1894 = vrot.slane %v1866, 1
        %v1895 = vrot.slane %v1594, 1
        %v1896 = vsel %vm851, %v1894, %v1895
        %v1897 = vrot.slane %v1867, 1
        %v1898 = vrot.slane %v1595, 1
        %v1899 = vsel %vm851, %v1897, %v1898
        %v1900 = vrot.slane %v1868, 1
        %v1901 = vrot.slane %v1596, 1
        %v1902 = vsel %vm851, %v1900, %v1901
        %v1903 = vrot.slane %v1869, 1
        %v1904 = vrot.slane %v1597, 1
        %v1905 = vsel %vm851, %v1903, %v1904
        %v1906 = vrot.slane %v1870, 1
        %v1907 = vrot.slane %v1598, 1
        %v1908 = vsel %vm851, %v1906, %v1907
        %v1909 = vrot.slane %v1871, 1
        %v1910 = vrot.slane %v1599, 1
        %v1911 = vsel %vm851, %v1909, %v1910
        %v1912 = vrot.slane %v1872, 1
        %v1913 = vrot.slane %v1600, 1
        %v1914 = vsel %vm851, %v1912, %v1913
        %v1915 = vrot.slane %v1873, 1
        %v1916 = vrot.slane %v1601, 1
        %v1917 = vsel %vm851, %v1915, %v1916
        %v1918 = vrot.slane %v1874, 1
        %v1919 = vrot.slane %v1602, 1
        %v1920 = vsel %vm851, %v1918, %v1919
        %v1921 = vrot.slane %v1875, 1
        %v1922 = vrot.slane %v1603, 1
        %v1923 = vsel %vm851, %v1921, %v1922
        %1924 = vrot.lane.b32.xlu0 %v1878, 32
        %v1925 = vpop.permute.xlu0 %1924
        %1926 = vrot.lane.b32.xlu0 %v1881, 32
        %v1927 = vpop.permute.xlu0 %1926
        %1928 = vrot.lane.b32.xlu0 %v1884, 32
        %v1929 = vpop.permute.xlu0 %1928
        %1930 = vrot.lane.b32.xlu0 %v1887, 32
        %v1931 = vpop.permute.xlu0 %1930
        %1932 = vrot.lane.b32.xlu0 %v1890, 32
        %v1933 = vpop.permute.xlu0 %1932
        %1934 = vrot.lane.b32.xlu0 %v1893, 32
        %v1935 = vpop.permute.xlu0 %1934
        %1936 = vrot.lane.b32.xlu0 %v1896, 32
        %v1937 = vpop.permute.xlu0 %1936
        %1938 = vrot.lane.b32.xlu0 %v1899, 32
        %v1939 = vpop.permute.xlu0 %1938
        %1940 = vrot.lane.b32.xlu0 %v1902, 32
        %v1941 = vpop.permute.xlu0 %1940
        %1942 = vrot.lane.b32.xlu0 %v1905, 32
        %v1943 = vpop.permute.xlu0 %1942
        %1944 = vrot.lane.b32.xlu0 %v1908, 32
        %v1945 = vpop.permute.xlu0 %1944
        %1946 = vrot.lane.b32.xlu0 %v1911, 32
        %v1947 = vpop.permute.xlu0 %1946
        %1948 = vrot.lane.b32.xlu0 %v1914, 32
        %v1949 = vpop.permute.xlu0 %1948
        %1950 = vrot.lane.b32.xlu0 %v1917, 32
        %v1951 = vpop.permute.xlu0 %1950
        %1952 = vrot.lane.b32.xlu0 %v1920, 32
        %v1953 = vpop.permute.xlu0 %1952
        %1954 = vrot.lane.b32.xlu0 %v1923, 32
        %v1955 = vpop.permute.xlu0 %1954
        %vm1956 = vcmask 31744
        %v1958 = vsel %vm1956, %v514, %v772
        %v1960 = vsel %vm1956, %v515, %v774
        %v1962 = vsel %vm1956, %v516, %v776
        %v1964 = vsel %vm1956, %v517, %v778
        %v1966 = vsel %vm1956, %v518, %v780
        %v1968 = vsel %vm1956, %v519, %v782
        %v1970 = vsel %vm1956, %v520, %v784
        %v1972 = vsel %vm1956, %v521, %v786
        %v1974 = vsel %vm1956, %v522, %v788
        %v1976 = vsel %vm1956, %v523, %v790
        %v1978 = vsel %vm1956, %v524, %v792
        %v1980 = vsel %vm1956, %v525, %v794
        %v1982 = vsel %vm1956, %v526, %v796
        %v1984 = vsel %vm1956, %v527, %v798
        %v1986 = vsel %vm1956, %v528, %v800
        %v1988 = vsel %vm1956, %v529, %v802
        %vm1989 = vcmask 64512
        %v1991 = vsel %vm1989, %v1958, %v901
        %v1993 = vsel %vm1989, %v1960, %v903
        %v1995 = vsel %vm1989, %v1962, %v905
        %v1997 = vsel %vm1989, %v1964, %v907
        %v1999 = vsel %vm1989, %v1966, %v909
        %v2001 = vsel %vm1989, %v1968, %v911
        %v2003 = vsel %vm1989, %v1970, %v913
        %v2005 = vsel %vm1989, %v1972, %v915
        %v2007 = vsel %vm1989, %v1974, %v917
        %v2009 = vsel %vm1989, %v1976, %v919
        %v2011 = vsel %vm1989, %v1978, %v921
        %v2013 = vsel %vm1989, %v1980, %v923
        %v2015 = vsel %vm1989, %v1982, %v925
        %v2017 = vsel %vm1989, %v1984, %v927
        %v2019 = vsel %vm1989, %v1986, %v929
        %v2021 = vsel %vm1989, %v1988, %v931
        %vm2022 = vcmask 97280
        %v2024 = vsel %vm2022, %v1991, %v1013
        %v2026 = vsel %vm2022, %v1993, %v1015
        %v2028 = vsel %vm2022, %v1995, %v1017
        %v2030 = vsel %vm2022, %v1997, %v1019
        %v2032 = vsel %vm2022, %v1999, %v1021
        %v2034 = vsel %vm2022, %v2001, %v1023
        %v2036 = vsel %vm2022, %v2003, %v1025
        %v2038 = vsel %vm2022, %v2005, %v1027
        %v2040 = vsel %vm2022, %v2007, %v1029
        %v2042 = vsel %vm2022, %v2009, %v1031
        %v2044 = vsel %vm2022, %v2011, %v1033
        %v2046 = vsel %vm2022, %v2013, %v1035
        %v2048 = vsel %vm2022, %v2015, %v1037
        %v2050 = vsel %vm2022, %v2017, %v1039
        %v2052 = vsel %vm2022, %v2019, %v1041
        %v2054 = vsel %vm2022, %v2021, %v1043
        %vm2055 = vcmask 130048
        %v2057 = vsel %vm2055, %v2024, %v1285
        %v2059 = vsel %vm2055, %v2026, %v1287
        %v2061 = vsel %vm2055, %v2028, %v1289
        %v2063 = vsel %vm2055, %v2030, %v1291
        %v2065 = vsel %vm2055, %v2032, %v1293
        %v2067 = vsel %vm2055, %v2034, %v1295
        %v2069 = vsel %vm2055, %v2036, %v1297
        %v2071 = vsel %vm2055, %v2038, %v1299
        %v2073 = vsel %vm2055, %v2040, %v1301
        %v2075 = vsel %vm2055, %v2042, %v1303
        %v2077 = vsel %vm2055, %v2044, %v1305
        %v2079 = vsel %vm2055, %v2046, %v1307
        %v2081 = vsel %vm2055, %v2048, %v1309
        %v2083 = vsel %vm2055, %v2050, %v1311
        %v2085 = vsel %vm2055, %v2052, %v1313
        %v2087 = vsel %vm2055, %v2054, %v1315
        %vm2088 = vcmask 162816
        %v2090 = vsel %vm2088, %v2057, %v1413
        %v2092 = vsel %vm2088, %v2059, %v1415
        %v2094 = vsel %vm2088, %v2061, %v1417
        %v2096 = vsel %vm2088, %v2063, %v1419
        %v2098 = vsel %vm2088, %v2065, %v1421
        %v2100 = vsel %vm2088, %v2067, %v1423
        %v2102 = vsel %vm2088, %v2069, %v1425
        %v2104 = vsel %vm2088, %v2071, %v1427
        %v2106 = vsel %vm2088, %v2073, %v1429
        %v2108 = vsel %vm2088, %v2075, %v1431
        %v2110 = vsel %vm2088, %v2077, %v1433
        %v2112 = vsel %vm2088, %v2079, %v1435
        %v2114 = vsel %vm2088, %v2081, %v1437
        %v2116 = vsel %vm2088, %v2083, %v1439
        %v2118 = vsel %vm2088, %v2085, %v1441
        %v2120 = vsel %vm2088, %v2087, %v1443
        %vm2121 = vcmask 195584
        %v2123 = vsel %vm2121, %v2090, %v1525
        %v2125 = vsel %vm2121, %v2092, %v1527
        %v2127 = vsel %vm2121, %v2094, %v1529
        %v2129 = vsel %vm2121, %v2096, %v1531
        %v2131 = vsel %vm2121, %v2098, %v1533
        %v2133 = vsel %vm2121, %v2100, %v1535
        %v2135 = vsel %vm2121, %v2102, %v1537
        %v2137 = vsel %vm2121, %v2104, %v1539
        %v2139 = vsel %vm2121, %v2106, %v1541
        %v2141 = vsel %vm2121, %v2108, %v1543
        %v2143 = vsel %vm2121, %v2110, %v1545
        %v2145 = vsel %vm2121, %v2112, %v1547
        %v2147 = vsel %vm2121, %v2114, %v1549
        %v2149 = vsel %vm2121, %v2116, %v1551
        %v2151 = vsel %vm2121, %v2118, %v1553
        %v2153 = vsel %vm2121, %v2120, %v1555
        %vm2154 = vcmask 228352
        %v2156 = vsel %vm2154, %v2123, %v1797
        %v2158 = vsel %vm2154, %v2125, %v1799
        %v2160 = vsel %vm2154, %v2127, %v1801
        %v2162 = vsel %vm2154, %v2129, %v1803
        %v2164 = vsel %vm2154, %v2131, %v1805
        %v2166 = vsel %vm2154, %v2133, %v1807
        %v2168 = vsel %vm2154, %v2135, %v1809
        %v2170 = vsel %vm2154, %v2137, %v1811
        %v2172 = vsel %vm2154, %v2139, %v1813
        %v2174 = vsel %vm2154, %v2141, %v1815
        %v2176 = vsel %vm2154, %v2143, %v1817
        %v2178 = vsel %vm2154, %v2145, %v1819
        %v2180 = vsel %vm2154, %v2147, %v1821
        %v2182 = vsel %vm2154, %v2149, %v1823
        %v2184 = vsel %vm2154, %v2151, %v1825
        %v2186 = vsel %vm2154, %v2153, %v1827
        %vm2187 = vcmask 261120
        %v2189 = vsel %vm2187, %v2156, %v1925
        %v2191 = vsel %vm2187, %v2158, %v1927
        %v2193 = vsel %vm2187, %v2160, %v1929
        %v2195 = vsel %vm2187, %v2162, %v1931
        %v2197 = vsel %vm2187, %v2164, %v1933
        %v2199 = vsel %vm2187, %v2166, %v1935
        %v2201 = vsel %vm2187, %v2168, %v1937
        %v2203 = vsel %vm2187, %v2170, %v1939
        %v2205 = vsel %vm2187, %v2172, %v1941
        %v2207 = vsel %vm2187, %v2174, %v1943
        %v2209 = vsel %vm2187, %v2176, %v1945
        %v2211 = vsel %vm2187, %v2178, %v1947
        %v2213 = vsel %vm2187, %v2180, %v1949
        %v2215 = vsel %vm2187, %v2182, %v1951
        %v2217 = vsel %vm2187, %v2184, %v1953
        %v2219 = vsel %vm2187, %v2186, %v1955
        %v2220 = vld [vmem:[%s248] sm:$0xf]
        %v2221 = vld [vmem:[%s248 + $0x4] sm:$0xf]
        %v2222 = vld [vmem:[%s248 + $0x8] sm:$0xf]
        %v2223 = vld [vmem:[%s248 + $0xc] sm:$0xf]
        %v2224 = vld [vmem:[%s248 + $0x10] sm:$0x3]
        %v2230 = vunpack.c.l.b16 %v2220
        %v2231 = vunpack.c.l.b16 %v2221
        %v2232 = vunpack.c.l.b16 %v2222
        %v2233 = vunpack.c.l.b16 %v2223
        %v2234 = vunpack.c.l.b16 %v2224
        %v2235 = vpack.c.b16 %v2231, %v2230
        %v2236 = vpack.c.b16 %v2233, %v2232
        %v2237 = vpack.c.b16 %v2234, %v2234
        %vm2240 = vcmask 293888
        %v2241 = vsel %vm2240, %v2189, 0
        %v2243 = vsel %vm2240, %v2191, 0
        %v2245 = vsel %vm2240, %v2193, 0
        %v2247 = vsel %vm2240, %v2195, 0
        %v2249 = vsel %vm2240, %v2197, 0
        %v2251 = vsel %vm2240, %v2199, 0
        %v2253 = vsel %vm2240, %v2201, 0
        %v2255 = vsel %vm2240, %v2203, 0
        %v2257 = vsel %vm2240, %v2205, 0
        %v2259 = vsel %vm2240, %v2207, 0
        %v2261 = vsel %vm2240, %v2209, 0
        %v2263 = vsel %vm2240, %v2211, 0
        %v2265 = vsel %vm2240, %v2213, 0
        %v2267 = vsel %vm2240, %v2215, 0
        %v2269 = vsel %vm2240, %v2217, 0
        %v2271 = vsel %vm2240, %v2219, 0
        %vm2273 = vcmask 1041408
        %v2275 = vsel %vm2273, %v2237, 0
        %2277 = vmatpush.bf16.msra.mxu0 0
        %2278 = vmatpush.bf16.msra.mxu0 0
        %2279 = vmatpush.bf16.msra.mxu0 0
        %2280 = vmatpush.bf16.msra.mxu0 0
        %2281 = vmatpush.bf16.msra.mxu0 0
        %2282 = vmatpush.bf16.msra.mxu0 %v2275
        %2283 = vmatpush.bf16.msra.mxu0 %v2236
        %2284 = vmatpush.bf16.msra.mxu0 %v2235
        %2285 = vmatmul.bf16.gmra.mxu0 %v2241
        %v2286 = vpop.f32.mrf.mxu0
        %v2287 = vadd.f32 0.0, %v2286
        %v2288 = vpop.f32.mrf.mxu0
        %v2289 = vadd.f32 0.0, %v2288
        %2290 = vmatmul.bf16.gmra.mxu0 %v2243
        %v2291 = vpop.f32.mrf.mxu0
        %v2292 = vadd.f32 0.0, %v2291
        %v2293 = vpop.f32.mrf.mxu0
        %v2294 = vadd.f32 0.0, %v2293
        %2295 = vmatmul.bf16.gmra.mxu0 %v2245
        %v2296 = vpop.f32.mrf.mxu0
        %v2297 = vadd.f32 0.0, %v2296
        %v2298 = vpop.f32.mrf.mxu0
        %v2299 = vadd.f32 0.0, %v2298
        %2300 = vmatmul.bf16.gmra.mxu0 %v2247
        %v2301 = vpop.f32.mrf.mxu0
        %v2302 = vadd.f32 0.0, %v2301
        %v2303 = vpop.f32.mrf.mxu0
        %v2304 = vadd.f32 0.0, %v2303
        %2305 = vmatmul.bf16.gmra.mxu0 %v2249
        %v2306 = vpop.f32.mrf.mxu0
        %v2307 = vadd.f32 0.0, %v2306
        %v2308 = vpop.f32.mrf.mxu0
        %v2309 = vadd.f32 0.0, %v2308
        %2310 = vmatmul.bf16.gmra.mxu0 %v2251
        %v2311 = vpop.f32.mrf.mxu0
        %v2312 = vadd.f32 0.0, %v2311
        %v2313 = vpop.f32.mrf.mxu0
        %v2314 = vadd.f32 0.0, %v2313
        %2315 = vmatmul.bf16.gmra.mxu0 %v2253
        %v2316 = vpop.f32.mrf.mxu0
        %v2317 = vadd.f32 0.0, %v2316
        %v2318 = vpop.f32.mrf.mxu0
        %v2319 = vadd.f32 0.0, %v2318
        %2320 = vmatmul.bf16.gmra.mxu0 %v2255
        %v2321 = vpop.f32.mrf.mxu0
        %v2322 = vadd.f32 0.0, %v2321
        %v2323 = vpop.f32.mrf.mxu0
        %v2324 = vadd.f32 0.0, %v2323
        %2325 = vmatmul.bf16.gmra.mxu0 %v2257
        %v2326 = vpop.f32.mrf.mxu0
        %v2327 = vadd.f32 0.0, %v2326
        %v2328 = vpop.f32.mrf.mxu0
        %v2329 = vadd.f32 0.0, %v2328
        %2330 = vmatmul.bf16.gmra.mxu0 %v2259
        %v2331 = vpop.f32.mrf.mxu0
        %v2332 = vadd.f32 0.0, %v2331
        %v2333 = vpop.f32.mrf.mxu0
        %v2334 = vadd.f32 0.0, %v2333
        %2335 = vmatmul.bf16.gmra.mxu0 %v2261
        %v2336 = vpop.f32.mrf.mxu0
        %v2337 = vadd.f32 0.0, %v2336
        %v2338 = vpop.f32.mrf.mxu0
        %v2339 = vadd.f32 0.0, %v2338
        %2340 = vmatmul.bf16.gmra.mxu0 %v2263
        %v2341 = vpop.f32.mrf.mxu0
        %v2342 = vadd.f32 0.0, %v2341
        %v2343 = vpop.f32.mrf.mxu0
        %v2344 = vadd.f32 0.0, %v2343
        %2345 = vmatmul.bf16.gmra.mxu0 %v2265
        %v2346 = vpop.f32.mrf.mxu0
        %v2347 = vadd.f32 0.0, %v2346
        %v2348 = vpop.f32.mrf.mxu0
        %v2349 = vadd.f32 0.0, %v2348
        %2350 = vmatmul.bf16.gmra.mxu0 %v2267
        %v2351 = vpop.f32.mrf.mxu0
        %v2352 = vadd.f32 0.0, %v2351
        %v2353 = vpop.f32.mrf.mxu0
        %v2354 = vadd.f32 0.0, %v2353
        %2355 = vmatmul.bf16.gmra.mxu0 %v2269
        %v2356 = vpop.f32.mrf.mxu0
        %v2357 = vadd.f32 0.0, %v2356
        %v2358 = vpop.f32.mrf.mxu0
        %v2359 = vadd.f32 0.0, %v2358
        %2360 = vmatmul.bf16.gmra.mxu0 %v2271
        %v2361 = vpop.f32.mrf.mxu0
        %v2362 = vadd.f32 0.0, %v2361
        %v2363 = vpop.f32.mrf.mxu0
        %v2364 = vadd.f32 0.0, %v2363
        %2365 = vdwg.mxu0
        %v2366 = vld [vmem:[%s251] sm:$0x1]
        %v2368 = vperm.slane %v2366, 0
        %v2370 = vmul.f32 %v2287, %v2368
        %v2371 = vmul.f32 %v2289, %v2368
        %v2372 = vmul.f32 %v2292, %v2368
        %v2373 = vmul.f32 %v2294, %v2368
        %v2374 = vmul.f32 %v2297, %v2368
        %v2375 = vmul.f32 %v2299, %v2368
        %v2376 = vmul.f32 %v2302, %v2368
        %v2377 = vmul.f32 %v2304, %v2368
        %v2378 = vmul.f32 %v2307, %v2368
        %v2379 = vmul.f32 %v2309, %v2368
        %v2380 = vmul.f32 %v2312, %v2368
        %v2381 = vmul.f32 %v2314, %v2368
        %v2382 = vmul.f32 %v2317, %v2368
        %v2383 = vmul.f32 %v2319, %v2368
        %v2384 = vmul.f32 %v2322, %v2368
        %v2385 = vmul.f32 %v2324, %v2368
        %v2386 = vmul.f32 %v2327, %v2368
        %v2387 = vmul.f32 %v2329, %v2368
        %v2388 = vmul.f32 %v2332, %v2368
        %v2389 = vmul.f32 %v2334, %v2368
        %v2390 = vmul.f32 %v2337, %v2368
        %v2391 = vmul.f32 %v2339, %v2368
        %v2392 = vmul.f32 %v2342, %v2368
        %v2393 = vmul.f32 %v2344, %v2368
        %v2394 = vmul.f32 %v2347, %v2368
        %v2395 = vmul.f32 %v2349, %v2368
        %v2396 = vmul.f32 %v2352, %v2368
        %v2397 = vmul.f32 %v2354, %v2368
        %v2398 = vmul.f32 %v2357, %v2368
        %v2399 = vmul.f32 %v2359, %v2368
        %v2400 = vmul.f32 %v2362, %v2368
        %v2401 = vmul.f32 %v2364, %v2368
        %v2402 = vld [vmem:[%s254] sm:$0x1]
        %v2404 = vperm.slane %v2402, 0
        %v2406 = vadd.f32 %v2370, %v2404
        %v2407 = vadd.f32 %v2371, %v2404
        %v2408 = vadd.f32 %v2372, %v2404
        %v2409 = vadd.f32 %v2373, %v2404
        %v2410 = vadd.f32 %v2374, %v2404
        %v2411 = vadd.f32 %v2375, %v2404
        %v2412 = vadd.f32 %v2376, %v2404
        %v2413 = vadd.f32 %v2377, %v2404
        %v2414 = vadd.f32 %v2378, %v2404
        %v2415 = vadd.f32 %v2379, %v2404
        %v2416 = vadd.f32 %v2380, %v2404
        %v2417 = vadd.f32 %v2381, %v2404
        %v2418 = vadd.f32 %v2382, %v2404
        %v2419 = vadd.f32 %v2383, %v2404
        %v2420 = vadd.f32 %v2384, %v2404
        %v2421 = vadd.f32 %v2385, %v2404
        %v2422 = vadd.f32 %v2386, %v2404
        %v2423 = vadd.f32 %v2387, %v2404
        %v2424 = vadd.f32 %v2388, %v2404
        %v2425 = vadd.f32 %v2389, %v2404
        %v2426 = vadd.f32 %v2390, %v2404
        %v2427 = vadd.f32 %v2391, %v2404
        %v2428 = vadd.f32 %v2392, %v2404
        %v2429 = vadd.f32 %v2393, %v2404
        %v2430 = vadd.f32 %v2394, %v2404
        %v2431 = vadd.f32 %v2395, %v2404
        %v2432 = vadd.f32 %v2396, %v2404
        %v2433 = vadd.f32 %v2397, %v2404
        %v2434 = vadd.f32 %v2398, %v2404
        %v2435 = vadd.f32 %v2399, %v2404
        %v2436 = vadd.f32 %v2400, %v2404
        %v2437 = vadd.f32 %v2401, %v2404
        %v2438 = vmax.f32 %v2406, 0.0
        %v2439 = vmax.f32 %v2407, 0.0
        %v2440 = vmax.f32 %v2408, 0.0
        %v2441 = vmax.f32 %v2409, 0.0
        %v2442 = vmax.f32 %v2410, 0.0
        %v2443 = vmax.f32 %v2411, 0.0
        %v2444 = vmax.f32 %v2412, 0.0
        %v2445 = vmax.f32 %v2413, 0.0
        %v2446 = vmax.f32 %v2414, 0.0
        %v2447 = vmax.f32 %v2415, 0.0
        %v2448 = vmax.f32 %v2416, 0.0
        %v2449 = vmax.f32 %v2417, 0.0
        %v2450 = vmax.f32 %v2418, 0.0
        %v2451 = vmax.f32 %v2419, 0.0
        %v2452 = vmax.f32 %v2420, 0.0
        %v2453 = vmax.f32 %v2421, 0.0
        %v2454 = vmax.f32 %v2422, 0.0
        %v2455 = vmax.f32 %v2423, 0.0
        %v2456 = vmax.f32 %v2424, 0.0
        %v2457 = vmax.f32 %v2425, 0.0
        %v2458 = vmax.f32 %v2426, 0.0
        %v2459 = vmax.f32 %v2427, 0.0
        %v2460 = vmax.f32 %v2428, 0.0
        %v2461 = vmax.f32 %v2429, 0.0
        %v2462 = vmax.f32 %v2430, 0.0
        %v2463 = vmax.f32 %v2431, 0.0
        %v2464 = vmax.f32 %v2432, 0.0
        %v2465 = vmax.f32 %v2433, 0.0
        %v2466 = vmax.f32 %v2434, 0.0
        %v2467 = vmax.f32 %v2435, 0.0
        %v2468 = vmax.f32 %v2436, 0.0
        %v2469 = vmax.f32 %v2437, 0.0
        %2470 = vst [vmem:[%s239] sm:$0xff] %v2438
        %2471 = vst [vmem:[%s239 + $0x8] sm:$0xff] %v2439
        %2472 = vst [vmem:[%s239 + $0x10] sm:$0xff] %v2440
        %2473 = vst [vmem:[%s239 + $0x18] sm:$0xff] %v2441
        %2474 = vst [vmem:[%s239 + $0x20] sm:$0xff] %v2442
        %2475 = vst [vmem:[%s239 + $0x28] sm:$0xff] %v2443
        %2476 = vst [vmem:[%s239 + $0x30] sm:$0xff] %v2444
        %2477 = vst [vmem:[%s239 + $0x38] sm:$0xff] %v2445
        %2478 = vst [vmem:[%s239 + $0x40] sm:$0xff] %v2446
        %2479 = vst [vmem:[%s239 + $0x48] sm:$0xff] %v2447
        %2480 = vst [vmem:[%s239 + $0x50] sm:$0xff] %v2448
        %2481 = vst [vmem:[%s239 + $0x58] sm:$0xff] %v2449
        %2482 = vst [vmem:[%s239 + $0x60] sm:$0xff] %v2450
        %2483 = vst [vmem:[%s239 + $0x68] sm:$0xff] %v2451
        %2484 = vst [vmem:[%s239 + $0x70] sm:$0xff] %v2452
        %2485 = vst [vmem:[%s239 + $0x78] sm:$0xff] %v2453
        %2486 = vst [vmem:[%s239 + $0x80] sm:$0xff] %v2454
        %2487 = vst [vmem:[%s239 + $0x88] sm:$0xff] %v2455
        %2488 = vst [vmem:[%s239 + $0x90] sm:$0xff] %v2456
        %2489 = vst [vmem:[%s239 + $0x98] sm:$0xff] %v2457
        %2490 = vst [vmem:[%s239 + $0xa0] sm:$0xff] %v2458
        %2491 = vst [vmem:[%s239 + $0xa8] sm:$0xff] %v2459
        %2492 = vst [vmem:[%s239 + $0xb0] sm:$0xff] %v2460
        %2493 = vst [vmem:[%s239 + $0xb8] sm:$0xff] %v2461
        %2494 = vst [vmem:[%s239 + $0xc0] sm:$0xff] %v2462
        %2495 = vst [vmem:[%s239 + $0xc8] sm:$0xff] %v2463
        %2496 = vst [vmem:[%s239 + $0xd0] sm:$0xff] %v2464
        %2497 = vst [vmem:[%s239 + $0xd8] sm:$0xff] %v2465
        %2498 = vst [vmem:[%s239 + $0xe0] sm:$0xff] %v2466
        %2499 = vst [vmem:[%s239 + $0xe8] sm:$0xff] %v2467
        %2500 = vst [vmem:[%s239 + $0xf0] sm:$0xff] %v2468
        %2501 = vst [vmem:[%s239 + $0xf8] sm:$0xff] %v2469
        %s2502 = sand.u32 %s144, 1
        %s2503 = scalar_lea.sflag [#allocation3], %s2502
        %s2504 = sand.u32 %s144, 1
        %s2505 = smul.addr %s2504, 256
        %s2506 = scalar_lea.vmem [#allocation2], %s2505
        // Predicated region
        $region37: #{tpu_custom_call.1} parent=35 // pred_check
          %p2507 = pneg %p154
        $region38: #{tpu_custom_call.1} parent=35 // pred_check_branch
          %2509 = sbr.rel (%p2507) target = $region40
        $region39: #{tpu_custom_call.1} parent=35 // pred_region
          %2511 = vsyncadd %s2503, 0
          %s2512 = smul.addr %s22, 32
          %s2513 = sadd.s32 %s23, %s2512
          %s2514 = smul.addr %s2513, 8
          %s2515 = scalar_lea.hbm %s4, %s2514
          %s2516 = sshll.u32 %s2506, 4
          %s2517 = int_to_ptr.vmem [resolvable:$true] %s2516
          %s2518 = sshll.u32 %s2515, 4
          %s2519 = int_to_ptr.hbm [resolvable:$true] %s2518
          %2524 = dma.vmem_to_hbm [thread:$0]  %s2517, 4096, %s2519, %s2503, 128, 128, 8
        $region40: #{tpu_custom_call.1} parent=35 // pred_fallthru
          _
      $region36: #{tpu_custom_call.1} parent=5 // pred_fallthru
        _
      %p2525 = scmp.le.s32.totalorder 2, %s13
      // Predicated region
      $region41: #{tpu_custom_call.1} parent=5 // pred_check
        %p2526 = pneg %p2525
      $region42: #{tpu_custom_call.1} parent=5 // pred_check_branch
        %2528 = sbr.rel (%p2526) target = $region44
      $region43: #{tpu_custom_call.1} parent=5 // pred_region
        %s2529 = ssub.s32 %s13, 2
        // Predicated region
        $region45: #{tpu_custom_call.1} parent=43 // pred_check
          %p2530 = pneg %p160
        $region46: #{tpu_custom_call.1} parent=43 // pred_check_branch
          %2532 = sbr.rel (%p2530) target = $region48
        $region47: #{tpu_custom_call.1} parent=43 // pred_region
          %s2533 = sand.u32 %s145, 1
          %s2534 = scalar_lea.sflag [#allocation3], %s2533
          %s2535 = sand.u32 %s145, 1
          %s2536 = smul.addr %s2535, 256
          %s2537 = scalar_lea.vmem [#allocation2], %s2536
          %2539 = dma.done %s2534, 4096
        $region48: #{tpu_custom_call.1} parent=43 // pred_fallthru
          _
      $region44: #{tpu_custom_call.1} parent=5 // pred_fallthru
        _
    $region6: #{tpu_custom_call.1} parent=1 // loop_footer
      %s17 = sadd.s32 1, %s13
    $region7: #{tpu_custom_call.1} parent=1 // loop_footer_branch
      %12 = sbr.rel target = $region3
    $region8: #{tpu_custom_call.1} parent=1 // loop_exit
      _
    %2540 = vsyncpa [#allocation3], 1
    %s2541 = scalar_lea.sflag [#allocation3], 1
    %2542 = vsyncpa %s2541, 1

</llo_original>
